<compile_context>
chip_gen: v6e
topology: v6e:2x2x1
jax: 0.10.0
libtpu: 0.0.40
codegen_flags: <defaults>
</compile_context>

<pallas_src>
import math

import jax
import jax.numpy as jnp
from jax import lax
from jax.experimental import pallas as pl
from jax.experimental.pallas import tpu as pltpu

# ---- module hyper-parameters (TFJSSpectrogram.__init__) ----
N_FFT = 32
HOP_LENGTH = 16
WIN_LENGTH = 32
APPLY_LINEAR_LOG = True
MEAN = 15.0
INVSTDDEV = 0.25

N_FREQ = N_FFT // 2 + 1                       # 17 (onesided)
F_PAD = ((N_FREQ + 7) // 8) * 8               # 24: sublane-aligned freq rows

X_CUTOFF = 0.01
SLOPE = 50.0
INTERCEPT_C = math.log(X_CUTOFF) - SLOPE * X_CUTOFF  # y_transition - slope*x_cutoff

TILE_T = 512   # frames (time) per grid step -> lane axis; multiple of 128


def _spectrogram_kernel(x_ref, nxt_ref, wa_ref, wb_ref, o_ref):
    """x:   (1, HOP, TILE_T)  half-frames, column t = half (block_start + t)
       nxt: (1, 1, HOP, 1)    half (block_start + TILE_T) (first half of next block)
       wa:  (2*F_PAD, HOP)    windowed DFT basis for samples 0..HOP-1 of a frame
       wb:  (2*F_PAD, HOP)    windowed DFT basis for samples HOP..N_FFT-1
       o:   (1, N_FREQ, TILE_T)."""
    x = x_ref[0]                                   # (HOP, TILE_T)
    nxt = nxt_ref[0, 0]                            # (HOP, 1)
    tile_t = x.shape[-1]

    # column t of x_shift = half (block_start + t + 1):
    # cyclic lane roll by one, then patch the last lane with the boundary column.
    x_shift = pltpu.roll(x, tile_t - 1, 1)         # == jnp.roll(x, -1, axis=1)
    lane = lax.broadcasted_iota(jnp.int32, x.shape, 1)
    x_shift = jnp.where(lane == tile_t - 1, nxt, x_shift)

    # frame t = [half t ; half t+1]  ->  one fused (re, im) matmul pair (MXU)
    reim = (jnp.dot(wa_ref[...], x, preferred_element_type=jnp.float32)
            + jnp.dot(wb_ref[...], x_shift, preferred_element_type=jnp.float32))
    re = reim[:F_PAD, :]                           # rows >= N_FREQ are zero padding
    im = reim[F_PAD:, :]
    power = re * re + im * im                      # |STFT|^2, (F_PAD, TILE_T)

    if APPLY_LINEAR_LOG:
        y = jnp.where(power > X_CUTOFF, jnp.log(power),
                      SLOPE * power + INTERCEPT_C)
    else:
        y = jnp.log(power + 1e-6)

    y = (y - MEAN) * INVSTDDEV
    o_ref[0] = y[:N_FREQ, :]                       # lane-dense (freq, time) store


def _hann_window(win_length):
    # torch.hann_window default (periodic=True): 0.5 - 0.5*cos(2*pi*n/N)
    n = jnp.arange(win_length, dtype=jnp.float32)
    return 0.5 - 0.5 * jnp.cos(2.0 * jnp.pi * n / win_length)


def _dft_basis():
    """Windowed real/imag DFT basis, (N_FREQ, N_FFT) each."""
    w = _hann_window(WIN_LENGTH)
    if WIN_LENGTH < N_FFT:
        pad_left = (N_FFT - WIN_LENGTH) // 2
        w = jnp.pad(w, (pad_left, N_FFT - WIN_LENGTH - pad_left))
    n = jnp.arange(N_FFT, dtype=jnp.float32)
    k = jnp.arange(N_FREQ, dtype=jnp.float32)
    ang = 2.0 * jnp.pi * k[:, None] * n[None, :] / N_FFT
    wc = w[None, :] * jnp.cos(ang)
    ws = -w[None, :] * jnp.sin(ang)
    return wc, ws


def _make_dft_weights():
    """Stacked (cos; sin) basis split into the two frame halves: two (2*F_PAD, HOP) mats."""
    wc, ws = _dft_basis()
    wt = jnp.zeros((2 * F_PAD, N_FFT), jnp.float32)
    wt = wt.at[:N_FREQ].set(wc)
    wt = wt.at[F_PAD:F_PAD + N_FREQ].set(ws)
    return wt[:, :HOP_LENGTH], wt[:, HOP_LENGTH:]


def tfjs_spectrogram(waveform, *, tile_t=TILE_T):
    """waveform: (B, T) -> (B, N_FREQ, n_frames) float32 (torch.stft (batch, freq, time))."""
    assert N_FFT == 2 * HOP_LENGTH, "half-frame decomposition needs hop == n_fft // 2"
    B, T = waveform.shape
    assert T >= N_FFT
    n_frames = 1 + (T - N_FFT) // HOP_LENGTH      # center=False

    # time tile (lane dim): multiple of 128, clamped to the problem size
    tile_t = max(128, min(tile_t, pl.cdiv(n_frames, 128) * 128))
    n_blocks = pl.cdiv(n_frames, tile_t)
    n_cols = n_blocks * tile_t                    # padded frame count (lane dim)

    # Rearrange raw waveform (1x data, no frame gather) into half-frame columns:
    #   x[b, :, h] = waveform[b, h*HOP : (h+1)*HOP];  frame t = (half t, half t+1)
    n_half = n_frames + 1                         # (n_frames+1)*HOP <= T always holds
    x = waveform[:, : n_half * HOP_LENGTH].astype(jnp.float32)
    x = x.reshape(B, n_half, HOP_LENGTH)
    x = jnp.transpose(x, (0, 2, 1))               # (B, HOP, n_half): time in lanes
    x = jnp.pad(x, ((0, 0), (0, 0), (0, n_cols + 1 - n_half)))

    # per-(batch, block) boundary column: first half of the next block
    nxt = x[:, :, tile_t::tile_t]                 # (B, HOP, n_blocks)
    nxt = jnp.transpose(nxt, (0, 2, 1))[..., None]  # (B, n_blocks, HOP, 1)

    wa, wb = _make_dft_weights()                  # (2*F_PAD, HOP) each, constant

    out = pl.pallas_call(
        _spectrogram_kernel,
        out_shape=jax.ShapeDtypeStruct((B, N_FREQ, n_cols), jnp.float32),
        grid_spec=pltpu.PrefetchScalarGridSpec(
            num_scalar_prefetch=0,
            grid=(B, n_blocks),
            in_specs=[
                pl.BlockSpec((1, HOP_LENGTH, tile_t), lambda b, i: (b, 0, i)),
                pl.BlockSpec((1, 1, HOP_LENGTH, 1), lambda b, i: (b, i, 0, 0)),
                # constant-index weight operands: never re-DMA'd across steps
                pl.BlockSpec((2 * F_PAD, HOP_LENGTH), lambda b, i: (0, 0)),
                pl.BlockSpec((2 * F_PAD, HOP_LENGTH), lambda b, i: (0, 0)),
            ],
            out_specs=pl.BlockSpec((1, N_FREQ, tile_t), lambda b, i: (b, 0, i)),
        ),
        compiler_params=pltpu.CompilerParams(
            dimension_semantics=("parallel", "parallel")),
    )(x, nxt, wa, wb)

    return out[:, :, :n_frames]                   # (batch, freq, time)


def _reference_spectrogram(waveform):
    """Plain-JAX reference mirroring the torch forward, for sanity checking."""
    B, T = waveform.shape
    n_frames = 1 + (T - N_FFT) // HOP_LENGTH
    starts = jnp.arange(n_frames) * HOP_LENGTH
    idx = starts[:, None] + jnp.arange(N_FFT)[None, :]
    frames = waveform[:, idx].astype(jnp.float32)             # (B, n_frames, n_fft)
    wc, ws = _dft_basis()                                     # (n_freq, n_fft)
    hp = jax.lax.Precision.HIGHEST
    re = jnp.einsum("btn,kn->bkt", frames, wc, precision=hp)
    im = jnp.einsum("btn,kn->bkt", frames, ws, precision=hp)
    power = re * re + im * im
    if APPLY_LINEAR_LOG:
        y = jnp.where(power > X_CUTOFF, jnp.log(power), SLOPE * power + INTERCEPT_C)
    else:
        y = jnp.log(power + 1e-6)
    return (y - MEAN) * INVSTDDEV                             # (B, n_freq, n_frames)


if __name__ == "__main__":
    key = jax.random.PRNGKey(0)
    B, T = 2, 16400          # ~1 s of 16 kHz audio -> 1024 STFT frames, 2 time-blocks
    waveform = jax.random.normal(key, (B, T), dtype=jnp.float32)

    spec_fn = jax.jit(tfjs_spectrogram)
    out = jax.block_until_ready(spec_fn(waveform))

    n_frames = 1 + (T - N_FFT) // HOP_LENGTH
    assert out.shape == (B, N_FREQ, n_frames), out.shape

    ref = _reference_spectrogram(waveform)
    max_err = float(jnp.max(jnp.abs(out - ref)))
    assert jnp.allclose(out, ref, atol=1e-2, rtol=1e-3), max_err

    print("KERNEL_OK")
</pallas_src>

<mosaic_0001>
module attributes {stable_mosaic.version = 11 : i64} {
  func.func @_spectrogram_kernel(%arg0: i32, %arg1: i32, %arg2: memref<1x16x512xf32, #tpu.memory_space<vmem>>, %arg3: memref<1x1x16x1xf32, #tpu.memory_space<vmem>>, %arg4: memref<48x16xf32, #tpu.memory_space<vmem>>, %arg5: memref<48x16xf32, #tpu.memory_space<vmem>>, %arg6: memref<1x17x512xf32, #tpu.memory_space<vmem>>) attributes {dimension_semantics = [#tpu.dimension_semantics<parallel>, #tpu.dimension_semantics<parallel>], iteration_bounds = array<i64: 2, 2>, scalar_prefetch = 0 : i64, scratch_operands = 0 : i64, tpu.core_type = #tpu.core_type<tc>, window_params = [{transform_indices = @transform_0, window_bounds = array<i64: 1, 16, 512>}, {transform_indices = @transform_1, window_bounds = array<i64: 1, 1, 16, 1>}, {pipeline_mode = #tpu.pipeline_mode<synchronous>, transform_indices = @transform_2, window_bounds = array<i64: 48, 16>}, {pipeline_mode = #tpu.pipeline_mode<synchronous>, transform_indices = @transform_3, window_bounds = array<i64: 48, 16>}, {transform_indices = @transform_4, window_bounds = array<i64: 1, 17, 512>}]} {
    %c0 = arith.constant 0 : index
    %c0_0 = arith.constant 0 : index
    %c0_1 = arith.constant 0 : index
    %0 = vector.load %arg2[%c0, %c0_0, %c0_1] : memref<1x16x512xf32, #tpu.memory_space<vmem>>, vector<1x16x512xf32>
    %1 = vector.shape_cast %0 : vector<1x16x512xf32> to vector<16x512xf32>
    %c0_2 = arith.constant 0 : index
    %c0_3 = arith.constant 0 : index
    %c0_4 = arith.constant 0 : index
    %c0_5 = arith.constant 0 : index
    %2 = vector.load %arg3[%c0_2, %c0_3, %c0_4, %c0_5] : memref<1x1x16x1xf32, #tpu.memory_space<vmem>>, vector<1x1x16x1xf32>
    %3 = vector.shape_cast %2 : vector<1x1x16x1xf32> to vector<16x1xf32>
    %c511_i32 = arith.constant 511 : i32
    %4 = tpu.dynamic_rotate %1 by %c511_i32 dim 1 : vector<16x512xf32>, i32 -> vector<16x512xf32>
    %5 = tpu.iota {dimensions = array<i32: 1>} : vector<16x512xi32>
    %c511_i32_6 = arith.constant 511 : i32
    %6 = vector.broadcast %c511_i32_6 : i32 to vector<16x512xi32>
    %7 = arith.cmpi eq, %5, %6 : vector<16x512xi32>
    %8 = vector.shape_cast %3 : vector<16x1xf32> to vector<16x1xf32>
    %9 = vector.broadcast %8 : vector<16x1xf32> to vector<16x512xf32>
    %10 = arith.select %7, %9, %4 : vector<16x512xi1>, vector<16x512xf32>
    %c0_7 = arith.constant 0 : index
    %c0_8 = arith.constant 0 : index
    %11 = vector.load %arg4[%c0_7, %c0_8] : memref<48x16xf32, #tpu.memory_space<vmem>>, vector<48x16xf32>
    %cst = arith.constant dense<0.000000e+00> : vector<48x512xf32>
    %12 = tpu.matmul %11, %1, %cst {dimension_numbers = #tpu.dot_dimension_numbers<[1], [0], [0], [1], [0, 0, 1, 1], [], []>} : vector<48x16xf32>, vector<16x512xf32>, vector<48x512xf32> -> vector<48x512xf32>
    %c0_9 = arith.constant 0 : index
    %c0_10 = arith.constant 0 : index
    %13 = vector.load %arg5[%c0_9, %c0_10] : memref<48x16xf32, #tpu.memory_space<vmem>>, vector<48x16xf32>
    %cst_11 = arith.constant dense<0.000000e+00> : vector<48x512xf32>
    %14 = tpu.matmul %13, %10, %cst_11 {dimension_numbers = #tpu.dot_dimension_numbers<[1], [0], [0], [1], [0, 0, 1, 1], [], []>} : vector<48x16xf32>, vector<16x512xf32>, vector<48x512xf32> -> vector<48x512xf32>
    %15 = arith.addf %12, %14 : vector<48x512xf32>
    %16 = vector.extract_strided_slice %15 {offsets = [0, 0], sizes = [24, 512], strides = [1, 1]} : vector<48x512xf32> to vector<24x512xf32>
    %17 = vector.extract_strided_slice %15 {offsets = [24, 0], sizes = [24, 512], strides = [1, 1]} : vector<48x512xf32> to vector<24x512xf32>
    %18 = arith.mulf %16, %16 : vector<24x512xf32>
    %19 = arith.mulf %17, %17 : vector<24x512xf32>
    %20 = arith.addf %18, %19 : vector<24x512xf32>
    %cst_12 = arith.constant 0.00999999977 : f32
    %21 = vector.broadcast %cst_12 : f32 to vector<24x512xf32>
    %22 = arith.cmpf ogt, %20, %21 : vector<24x512xf32>
    %23 = math.log %20 : vector<24x512xf32>
    %cst_13 = arith.constant 5.000000e+01 : f32
    %24 = vector.broadcast %cst_13 : f32 to vector<24x512xf32>
    %25 = arith.mulf %24, %20 : vector<24x512xf32>
    %cst_14 = arith.constant -5.10517025 : f32
    %26 = vector.broadcast %cst_14 : f32 to vector<24x512xf32>
    %27 = arith.addf %25, %26 : vector<24x512xf32>
    %28 = arith.select %22, %23, %27 : vector<24x512xi1>, vector<24x512xf32>
    %cst_15 = arith.constant 1.500000e+01 : f32
    %29 = vector.broadcast %cst_15 : f32 to vector<24x512xf32>
    %30 = arith.subf %28, %29 : vector<24x512xf32>
    %cst_16 = arith.constant 2.500000e-01 : f32
    %31 = vector.broadcast %cst_16 : f32 to vector<24x512xf32>
    %32 = arith.mulf %30, %31 : vector<24x512xf32>
    %33 = vector.extract_strided_slice %32 {offsets = [0, 0], sizes = [17, 512], strides = [1, 1]} : vector<24x512xf32> to vector<17x512xf32>
    %c0_17 = arith.constant 0 : index
    %c0_18 = arith.constant 0 : index
    %c0_19 = arith.constant 0 : index
    %34 = vector.load %arg6[%c0_17, %c0_18, %c0_19] : memref<1x17x512xf32, #tpu.memory_space<vmem>>, vector<1x17x512xf32>
    %35 = vector.shape_cast %34 : vector<1x17x512xf32> to vector<17x512xf32>
    %36 = vector.shape_cast %33 : vector<17x512xf32> to vector<1x17x512xf32>
    tpu.vector_store %arg6[%c0_17, %c0_18, %c0_19], %36 {strides = array<i32>} : memref<1x17x512xf32, #tpu.memory_space<vmem>>, vector<1x17x512xf32>,
    return
  }
  func.func @transform_0(%arg0: i32, %arg1: i32) -> (i32, i32, i32) {
    %c0_i32 = arith.constant 0 : i32
    %c0_i32_0 = arith.constant 0 : i32
    return %arg0, %c0_i32, %arg1 : i32, i32, i32
  }
  func.func @transform_1(%arg0: i32, %arg1: i32) -> (i32, i32, i32, i32) {
    %c0_i32 = arith.constant 0 : i32
    %c0_i32_0 = arith.constant 0 : i32
    %c0_i32_1 = arith.constant 0 : i32
    return %arg0, %arg1, %c0_i32, %c0_i32_0 : i32, i32, i32, i32
  }
  func.func @transform_2(%arg0: i32, %arg1: i32) -> (i32, i32) {
    %c0_i32 = arith.constant 0 : i32
    %c0_i32_0 = arith.constant 0 : i32
    %c0_i32_1 = arith.constant 0 : i32
    return %c0_i32, %c0_i32_0 : i32, i32
  }
  func.func @transform_3(%arg0: i32, %arg1: i32) -> (i32, i32) {
    %c0_i32 = arith.constant 0 : i32
    %c0_i32_0 = arith.constant 0 : i32
    %c0_i32_1 = arith.constant 0 : i32
    return %c0_i32, %c0_i32_0 : i32, i32
  }
  func.func @transform_4(%arg0: i32, %arg1: i32) -> (i32, i32, i32) {
    %c0_i32 = arith.constant 0 : i32
    %c0_i32_0 = arith.constant 0 : i32
    return %arg0, %c0_i32, %arg1 : i32, i32, i32
  }
}

</mosaic_0001>

<llo_original>
// kernel: tfjs_spectrogram.1
$region0: #{tfjs_spectrogram.1}
  #allocation0 [shape = 'u32[]', space=smem, size = 0x4, offset = 0x4, fixed_abs, tag = 'smem constant byte address 0x4 - core index']
  #allocation1 [shape = 'u32[144,128]{1,0:T(1,128)}', space=vmem, size = 0x12000, scoped, tag = 'internal scratch']
  %s0 = inlined_call_operand.vmem [shape: f32[2,16,1025], index: 0, kind: input, shape index: {}]
  %s1 = inlined_call_operand.vmem [shape: f32[2,2,16,1], index: 1, kind: input, shape index: {}]
  %s2 = inlined_call_operand.vmem [shape: f32[48,16], index: 2, kind: input, shape index: {}]
  %s3 = inlined_call_operand.vmem [shape: f32[48,16], index: 3, kind: input, shape index: {}]
  %s4 = inlined_call_operand.vmem [shape: f32[2,17,1024], index: 4, kind: output, shape index: {}]
  %s5 = sld [smem:[#allocation0]]
  $region134: #{tfjs_spectrogram.1} parent=0
    _
  %s7 = ssub.s32 1, %s5
  %s8 = scalar_select 0, %s7, %s5
  $region1: #{tfjs_spectrogram.1} parent=0
    #allocation2 [shape = 'u8[65536]{0}', space=vmem, size = 0x10000, scoped, tag = 'input window, operand 0']
    #allocation3 [shape = 'u8[98304]{0}', space=vmem, size = 0x18000, scoped, tag = 'output window, operand 0']
    loop: start=0, step=1, limit=6
    $region2: #{tfjs_spectrogram.1} parent=1 // loop_pre_header
      _
    $region3: #{tfjs_spectrogram.1} parent=1 // loop_header
      %s10 = sphi 0, %s14
      %p11 = scmp.ge.s32.totalorder %s10, 6
      %s17 = sphi 0, %s29
      %s18 = sphi 0, %s25
      %s19 = sphi 0, %s17
      %s20 = sphi 0, %s18
      %s21 = sphi 0, %s19
      %s22 = sphi 0, %s20
      %s34 = sphi 0, %s36
      %s37 = sphi 0, %s34
      %s38 = sphi 0, %s37
      %s54 = sphi 0, %s38
      %s62 = sphi 0, %s64
      %s65 = sphi 0, %s62
      %s66 = sphi 0, %s65
      %s82 = sphi 0, %s66
      %s86 = sphi 0, %s86
      %s88 = sphi 0, %s86
      %s89 = sphi 0, %s88
      %s103 = sphi 0, %s89
      %s107 = sphi 0, %s107
      %s109 = sphi 0, %s107
      %s110 = sphi 0, %s109
      %s124 = sphi 0, %s110
      %s132 = sphi 0, %s134
      %s135 = sphi 0, %s132
      %s136 = sphi 0, %s135
      %s152 = sphi 0, %s136
    $region4: #{tfjs_spectrogram.1} parent=1 // loop_header_branch
      %13 = sbr.rel (%p11) target = $region8
    $region5: #{tfjs_spectrogram.1} parent=1 // loop_body
      %s15 = ssub.s32 %s10, 1
      %s16 = ssub.s32 %s10, 2
      %s23 = sadd.s32 1, %s18
      %p24 = scmp.ge.s32.totalorder %s23, 2
      %s25 = scalar_select %p24, 0, %s23
      %s26 = sadd.s32 1, %s17
      %s27 = scalar_select %p24, %s26, %s17
      %p28 = scmp.ge.s32.totalorder %s27, 2
      %s29 = scalar_select %p28, 0, %s27
      %s30 = ssub.s32 %s17, %s29
      %s31 = ssub.s32 %s18, %s25
      %s32 = sor.u32 %s30, %s31
      %p33 = scmp.eq.s32.totalorder %s32, 0
      %s35 = sadd.s32 %s34, 1
      %s36 = scalar_select %p33, %s34, %s35
      %p39 = pneg %p33
      %p40 = scmp.eq.s32.totalorder %s10, 3
      %p41 = por %p39, %p40
      %p42 = scmp.ne.s32.totalorder %s34, %s37
      %p43 = scmp.eq.s32.totalorder %s10, 0
      %p44 = por %p42, %p43
      %p45 = scmp.ne.s32.totalorder %s34, %s37
      %p46 = scmp.eq.s32.totalorder %s15, 3
      %p47 = por %p45, %p46
      %p48 = scmp.ne.s32.totalorder %s37, %s38
      %p49 = scmp.eq.s32.totalorder %s15, 0
      %p50 = por %p48, %p49
      %p51 = scmp.ne.s32.totalorder %s37, %s38
      %p52 = scmp.eq.s32.totalorder %s16, 3
      %p53 = por %p51, %p52
      %p55 = scmp.ne.s32.totalorder %s38, %s54
      %p56 = scmp.eq.s32.totalorder %s16, 0
      %p57 = por %p55, %p56
      %s58 = ssub.s32 %s17, %s29
      %s59 = ssub.s32 %s18, %s25
      %s60 = sor.u32 %s58, %s59
      %p61 = scmp.eq.s32.totalorder %s60, 0
      %s63 = sadd.s32 %s62, 1
      %s64 = scalar_select %p61, %s62, %s63
      %p67 = pneg %p61
      %p68 = scmp.eq.s32.totalorder %s10, 3
      %p69 = por %p67, %p68
      %p70 = scmp.ne.s32.totalorder %s62, %s65
      %p71 = scmp.eq.s32.totalorder %s10, 0
      %p72 = por %p70, %p71
      %p73 = scmp.ne.s32.totalorder %s62, %s65
      %p74 = scmp.eq.s32.totalorder %s15, 3
      %p75 = por %p73, %p74
      %p76 = scmp.ne.s32.totalorder %s65, %s66
      %p77 = scmp.eq.s32.totalorder %s15, 0
      %p78 = por %p76, %p77
      %p79 = scmp.ne.s32.totalorder %s65, %s66
      %p80 = scmp.eq.s32.totalorder %s16, 3
      %p81 = por %p79, %p80
      %p83 = scmp.ne.s32.totalorder %s66, %s82
      %p84 = scmp.eq.s32.totalorder %s16, 0
      %p85 = por %p83, %p84
      %s87 = sadd.s32 %s86, 1
      %p90 = scmp.eq.s32.totalorder %s10, 3
      %p91 = scmp.ne.s32.totalorder %s86, %s88
      %p92 = scmp.eq.s32.totalorder %s10, 0
      %p93 = por %p91, %p92
      %p94 = scmp.ne.s32.totalorder %s86, %s88
      %p95 = scmp.eq.s32.totalorder %s15, 3
      %p96 = por %p94, %p95
      %p97 = scmp.ne.s32.totalorder %s88, %s89
      %p98 = scmp.eq.s32.totalorder %s15, 0
      %p99 = por %p97, %p98
      %p100 = scmp.ne.s32.totalorder %s88, %s89
      %p101 = scmp.eq.s32.totalorder %s16, 3
      %p102 = por %p100, %p101
      %p104 = scmp.ne.s32.totalorder %s89, %s103
      %p105 = scmp.eq.s32.totalorder %s16, 0
      %p106 = por %p104, %p105
      %s108 = sadd.s32 %s107, 1
      %p111 = scmp.eq.s32.totalorder %s10, 3
      %p112 = scmp.ne.s32.totalorder %s107, %s109
      %p113 = scmp.eq.s32.totalorder %s10, 0
      %p114 = por %p112, %p113
      %p115 = scmp.ne.s32.totalorder %s107, %s109
      %p116 = scmp.eq.s32.totalorder %s15, 3
      %p117 = por %p115, %p116
      %p118 = scmp.ne.s32.totalorder %s109, %s110
      %p119 = scmp.eq.s32.totalorder %s15, 0
      %p120 = por %p118, %p119
      %p121 = scmp.ne.s32.totalorder %s109, %s110
      %p122 = scmp.eq.s32.totalorder %s16, 3
      %p123 = por %p121, %p122
      %p125 = scmp.ne.s32.totalorder %s110, %s124
      %p126 = scmp.eq.s32.totalorder %s16, 0
      %p127 = por %p125, %p126
      %s128 = ssub.s32 %s17, %s29
      %s129 = ssub.s32 %s18, %s25
      %s130 = sor.u32 %s128, %s129
      %p131 = scmp.eq.s32.totalorder %s130, 0
      %s133 = sadd.s32 %s132, 1
      %s134 = scalar_select %p131, %s132, %s133
      %p137 = pneg %p131
      %p138 = scmp.eq.s32.totalorder %s10, 3
      %p139 = por %p137, %p138
      %p140 = scmp.ne.s32.totalorder %s132, %s135
      %p141 = scmp.eq.s32.totalorder %s10, 0
      %p142 = por %p140, %p141
      %p143 = scmp.ne.s32.totalorder %s132, %s135
      %p144 = scmp.eq.s32.totalorder %s15, 3
      %p145 = por %p143, %p144
      %p146 = scmp.ne.s32.totalorder %s135, %s136
      %p147 = scmp.eq.s32.totalorder %s15, 0
      %p148 = por %p146, %p147
      %p149 = scmp.ne.s32.totalorder %s135, %s136
      %p150 = scmp.eq.s32.totalorder %s16, 3
      %p151 = por %p149, %p150
      %p153 = scmp.ne.s32.totalorder %s136, %s152
      %p154 = scmp.eq.s32.totalorder %s16, 0
      %p155 = por %p153, %p154
      %p156 = scmp.le.s32.totalorder 1, %s10
      %p157 = scmp.lt.s32.totalorder %s10, 5
      %p158 = pnand %p156, %p157
      %p159 = pneg %p158
      // Predicated region
      $region9: #{tfjs_spectrogram.1} parent=5 // pred_check
        _
      $region10: #{tfjs_spectrogram.1} parent=5 // pred_check_branch
        %161 = sbr.rel (%p158) target = $region12
      $region11: #{tfjs_spectrogram.1} parent=5 // pred_region
        %s162 = ssub.s32 %s10, 1
        // Predicated region
        $region13: #{tfjs_spectrogram.1} parent=11 // pred_check
          %p163 = pneg %p99
        $region14: #{tfjs_spectrogram.1} parent=11 // pred_check_branch
          %165 = sbr.rel (%p163) target = $region16
        $region15: #{tfjs_spectrogram.1} parent=11 // pred_region
          _
        $region16: #{tfjs_spectrogram.1} parent=11 // pred_fallthru
          _
        // Predicated region
        $region17: #{tfjs_spectrogram.1} parent=11 // pred_check
          %p166 = pneg %p120
        $region18: #{tfjs_spectrogram.1} parent=11 // pred_check_branch
          %168 = sbr.rel (%p166) target = $region20
        $region19: #{tfjs_spectrogram.1} parent=11 // pred_region
          _
        $region20: #{tfjs_spectrogram.1} parent=11 // pred_fallthru
          _
      $region12: #{tfjs_spectrogram.1} parent=5 // pred_fallthru
        _
      %p169 = scmp.lt.s32.totalorder %s10, 4
      // Predicated region
      $region21: #{tfjs_spectrogram.1} parent=5 // pred_check
        %p170 = pneg %p169
      $region22: #{tfjs_spectrogram.1} parent=5 // pred_check_branch
        %172 = sbr.rel (%p170) target = $region24
      $region23: #{tfjs_spectrogram.1} parent=5 // pred_region
        // Predicated region
        $region25: #{tfjs_spectrogram.1} parent=23 // pred_check
          %p173 = pneg %p44
        $region26: #{tfjs_spectrogram.1} parent=23 // pred_check_branch
          %175 = sbr.rel (%p173) target = $region28
        $region27: #{tfjs_spectrogram.1} parent=23 // pred_region
          %s176 = sand.u32 %s34, 1
          %s177 = sand.u32 %s34, 1
          %s178 = smul.addr %s177, 64
          %s179 = scalar_lea.vmem [#allocation2], %s178
          %s180 = smul.u32 4, %s18
          %s181 = ssub.s32 9, %s180
          %p182 = scmp.lt.s32.totalorder %s181, 4
          %s183 = scalar_select %p182, %s181, 4
          %s184 = smul.u32 256, %s183
          %p185 = scmp.ne.s32.totalorder 0, %s184
          %s186 = smul.addr %s17, 18
          %s187 = sadd.s32 %s180, %s186
          %s188 = smul.addr %s187, 8
          %s189 = scalar_lea.vmem %s0, %s188
          %s190 = smul.u32 %s183, 8
          // Predicated region
          $region29: #{tfjs_spectrogram.1} parent=27 // pred_check
            %p191 = pneg %p185
          $region30: #{tfjs_spectrogram.1} parent=27 // pred_check_branch
            %193 = sbr.rel (%p191) target = $region32
          $region31: #{tfjs_spectrogram.1} parent=27 // pred_region
            %p194 = scmp.lt.u32.totalorder %s190, 8
            %p195 = pneg %p194
            // Predicated region
            $region33: #{tfjs_spectrogram.1} parent=31 // pred_check
              _
            $region34: #{tfjs_spectrogram.1} parent=31 // pred_check_branch
              %197 = sbr.rel (%p194) target = $region36
            $region35: #{tfjs_spectrogram.1} parent=31 // pred_region
              %s215 = sand.u32 %s190, 7
              %p216 = scmp.eq.s32.totalorder %s215, 0
              // Predicated region
              $region48: #{tfjs_spectrogram.1} parent=35 // pred_check
                %p217 = pneg %p216
              $region49: #{tfjs_spectrogram.1} parent=35 // pred_check_branch
                %219 = sbr.rel (%p217) target = $region51
              $region50: #{tfjs_spectrogram.1} parent=35 // pred_region
                %s220 = sshrl.u32 %s190, 3
                %s221 = sshrl.u32 %s220, 5
                // While loop
                $region52: #{tfjs_spectrogram.1} parent=50 // loop_pre_header
                  _
                $region53: #{tfjs_spectrogram.1} parent=50 // loop_header
                  %s225 = sphi 0, %s227
                  %p226 = scmp.ge.s32.totalorder %s225, %s221
                  %s230 = sphi 0, %s363
                  %s231 = sphi %s189, %s366
                  %s232 = sphi %s179, %s367
                $region54: #{tfjs_spectrogram.1} parent=50 // loop_header_branch
                  %229 = sbr.rel (%p226) target = $region58
                $region55: #{tfjs_spectrogram.1} parent=50 // loop_body
                  %v233 = vld [vmem:[%s231] sm:$0xff]
                  %234 = vst [vmem:[%s232] sm:$0xff] %v233
                  %v235 = vld [vmem:[%s231 + $0x8] sm:$0xff]
                  %236 = vst [vmem:[%s232 + $0x8] sm:$0xff] %v235
                  %v237 = vld [vmem:[%s231 + $0x10] sm:$0xff]
                  %238 = vst [vmem:[%s232 + $0x10] sm:$0xff] %v237
                  %v239 = vld [vmem:[%s231 + $0x18] sm:$0xff]
                  %240 = vst [vmem:[%s232 + $0x18] sm:$0xff] %v239
                  %v241 = vld [vmem:[%s231 + $0x20] sm:$0xff]
                  %242 = vst [vmem:[%s232 + $0x20] sm:$0xff] %v241
                  %v243 = vld [vmem:[%s231 + $0x28] sm:$0xff]
                  %244 = vst [vmem:[%s232 + $0x28] sm:$0xff] %v243
                  %v245 = vld [vmem:[%s231 + $0x30] sm:$0xff]
                  %246 = vst [vmem:[%s232 + $0x30] sm:$0xff] %v245
                  %v247 = vld [vmem:[%s231 + $0x38] sm:$0xff]
                  %248 = vst [vmem:[%s232 + $0x38] sm:$0xff] %v247
                  %v249 = vld [vmem:[%s231 + $0x40] sm:$0xff]
                  %250 = vst [vmem:[%s232 + $0x40] sm:$0xff] %v249
                  %v251 = vld [vmem:[%s231 + $0x48] sm:$0xff]
                  %252 = vst [vmem:[%s232 + $0x48] sm:$0xff] %v251
                  %v253 = vld [vmem:[%s231 + $0x50] sm:$0xff]
                  %254 = vst [vmem:[%s232 + $0x50] sm:$0xff] %v253
                  %v255 = vld [vmem:[%s231 + $0x58] sm:$0xff]
                  %256 = vst [vmem:[%s232 + $0x58] sm:$0xff] %v255
                  %v257 = vld [vmem:[%s231 + $0x60] sm:$0xff]
                  %258 = vst [vmem:[%s232 + $0x60] sm:$0xff] %v257
                  %v259 = vld [vmem:[%s231 + $0x68] sm:$0xff]
                  %260 = vst [vmem:[%s232 + $0x68] sm:$0xff] %v259
                  %v261 = vld [vmem:[%s231 + $0x70] sm:$0xff]
                  %262 = vst [vmem:[%s232 + $0x70] sm:$0xff] %v261
                  %v263 = vld [vmem:[%s231 + $0x78] sm:$0xff]
                  %264 = vst [vmem:[%s232 + $0x78] sm:$0xff] %v263
                  %v265 = vld [vmem:[%s231 + $0x80] sm:$0xff]
                  %266 = vst [vmem:[%s232 + $0x80] sm:$0xff] %v265
                  %v267 = vld [vmem:[%s231 + $0x88] sm:$0xff]
                  %268 = vst [vmem:[%s232 + $0x88] sm:$0xff] %v267
                  %v269 = vld [vmem:[%s231 + $0x90] sm:$0xff]
                  %270 = vst [vmem:[%s232 + $0x90] sm:$0xff] %v269
                  %v271 = vld [vmem:[%s231 + $0x98] sm:$0xff]
                  %272 = vst [vmem:[%s232 + $0x98] sm:$0xff] %v271
                  %v273 = vld [vmem:[%s231 + $0xa0] sm:$0xff]
                  %274 = vst [vmem:[%s232 + $0xa0] sm:$0xff] %v273
                  %v275 = vld [vmem:[%s231 + $0xa8] sm:$0xff]
                  %276 = vst [vmem:[%s232 + $0xa8] sm:$0xff] %v275
                  %v277 = vld [vmem:[%s231 + $0xb0] sm:$0xff]
                  %278 = vst [vmem:[%s232 + $0xb0] sm:$0xff] %v277
                  %v279 = vld [vmem:[%s231 + $0xb8] sm:$0xff]
                  %280 = vst [vmem:[%s232 + $0xb8] sm:$0xff] %v279
                  %v281 = vld [vmem:[%s231 + $0xc0] sm:$0xff]
                  %282 = vst [vmem:[%s232 + $0xc0] sm:$0xff] %v281
                  %v283 = vld [vmem:[%s231 + $0xc8] sm:$0xff]
                  %284 = vst [vmem:[%s232 + $0xc8] sm:$0xff] %v283
                  %v285 = vld [vmem:[%s231 + $0xd0] sm:$0xff]
                  %286 = vst [vmem:[%s232 + $0xd0] sm:$0xff] %v285
                  %v287 = vld [vmem:[%s231 + $0xd8] sm:$0xff]
                  %288 = vst [vmem:[%s232 + $0xd8] sm:$0xff] %v287
                  %v289 = vld [vmem:[%s231 + $0xe0] sm:$0xff]
                  %290 = vst [vmem:[%s232 + $0xe0] sm:$0xff] %v289
                  %v291 = vld [vmem:[%s231 + $0xe8] sm:$0xff]
                  %292 = vst [vmem:[%s232 + $0xe8] sm:$0xff] %v291
                  %v293 = vld [vmem:[%s231 + $0xf0] sm:$0xff]
                  %294 = vst [vmem:[%s232 + $0xf0] sm:$0xff] %v293
                  %v295 = vld [vmem:[%s231 + $0xf8] sm:$0xff]
                  %296 = vst [vmem:[%s232 + $0xf8] sm:$0xff] %v295
                  %v297 = vld [vmem:[%s231 + $0x48] sm:$0xff]
                  %298 = vst [vmem:[%s232 + $0x20] sm:$0xff] %v297
                  %v299 = vld [vmem:[%s231 + $0x50] sm:$0xff]
                  %300 = vst [vmem:[%s232 + $0x28] sm:$0xff] %v299
                  %v301 = vld [vmem:[%s231 + $0x58] sm:$0xff]
                  %302 = vst [vmem:[%s232 + $0x30] sm:$0xff] %v301
                  %v303 = vld [vmem:[%s231 + $0x60] sm:$0xff]
                  %304 = vst [vmem:[%s232 + $0x38] sm:$0xff] %v303
                  %v305 = vld [vmem:[%s231 + $0x68] sm:$0xff]
                  %306 = vst [vmem:[%s232 + $0x40] sm:$0xff] %v305
                  %v307 = vld [vmem:[%s231 + $0x70] sm:$0xff]
                  %308 = vst [vmem:[%s232 + $0x48] sm:$0xff] %v307
                  %v309 = vld [vmem:[%s231 + $0x78] sm:$0xff]
                  %310 = vst [vmem:[%s232 + $0x50] sm:$0xff] %v309
                  %v311 = vld [vmem:[%s231 + $0x80] sm:$0xff]
                  %312 = vst [vmem:[%s232 + $0x58] sm:$0xff] %v311
                  %v313 = vld [vmem:[%s231 + $0x88] sm:$0xff]
                  %314 = vst [vmem:[%s232 + $0x60] sm:$0xff] %v313
                  %v315 = vld [vmem:[%s231 + $0x90] sm:$0xff]
                  %316 = vst [vmem:[%s232 + $0x68] sm:$0xff] %v315
                  %v317 = vld [vmem:[%s231 + $0x98] sm:$0xff]
                  %318 = vst [vmem:[%s232 + $0x70] sm:$0xff] %v317
                  %v319 = vld [vmem:[%s231 + $0xa0] sm:$0xff]
                  %320 = vst [vmem:[%s232 + $0x78] sm:$0xff] %v319
                  %v321 = vld [vmem:[%s231 + $0xa8] sm:$0xff]
                  %322 = vst [vmem:[%s232 + $0x80] sm:$0xff] %v321
                  %v323 = vld [vmem:[%s231 + $0xb0] sm:$0xff]
                  %324 = vst [vmem:[%s232 + $0x88] sm:$0xff] %v323
                  %v325 = vld [vmem:[%s231 + $0xb8] sm:$0xff]
                  %326 = vst [vmem:[%s232 + $0x90] sm:$0xff] %v325
                  %v327 = vld [vmem:[%s231 + $0xc0] sm:$0xff]
                  %328 = vst [vmem:[%s232 + $0x98] sm:$0xff] %v327
                  %v329 = vld [vmem:[%s231 + $0xc8] sm:$0xff]
                  %330 = vst [vmem:[%s232 + $0xa0] sm:$0xff] %v329
                  %v331 = vld [vmem:[%s231 + $0xd0] sm:$0xff]
                  %332 = vst [vmem:[%s232 + $0xa8] sm:$0xff] %v331
                  %v333 = vld [vmem:[%s231 + $0xd8] sm:$0xff]
                  %334 = vst [vmem:[%s232 + $0xb0] sm:$0xff] %v333
                  %v335 = vld [vmem:[%s231 + $0xe0] sm:$0xff]
                  %336 = vst [vmem:[%s232 + $0xb8] sm:$0xff] %v335
                  %v337 = vld [vmem:[%s231 + $0xe8] sm:$0xff]
                  %338 = vst [vmem:[%s232 + $0xc0] sm:$0xff] %v337
                  %v339 = vld [vmem:[%s231 + $0xf0] sm:$0xff]
                  %340 = vst [vmem:[%s232 + $0xc8] sm:$0xff] %v339
                  %v341 = vld [vmem:[%s231 + $0xf8] sm:$0xff]
                  %342 = vst [vmem:[%s232 + $0xd0] sm:$0xff] %v341
                  %v343 = vld [vmem:[%s231 + $0x100] sm:$0xff]
                  %344 = vst [vmem:[%s232 + $0xd8] sm:$0xff] %v343
                  %v345 = vld [vmem:[%s231 + $0x108] sm:$0xff]
                  %346 = vst [vmem:[%s232 + $0xe0] sm:$0xff] %v345
                  %v347 = vld [vmem:[%s231 + $0x110] sm:$0xff]
                  %348 = vst [vmem:[%s232 + $0xe8] sm:$0xff] %v347
                  %v349 = vld [vmem:[%s231 + $0x118] sm:$0xff]
                  %350 = vst [vmem:[%s232 + $0xf0] sm:$0xff] %v349
                  %v351 = vld [vmem:[%s231 + $0x120] sm:$0xff]
                  %352 = vst [vmem:[%s232 + $0xf8] sm:$0xff] %v351
                  %v353 = vld [vmem:[%s231 + $0x128] sm:$0xff]
                  %354 = vst [vmem:[%s232 + $0x100] sm:$0xff] %v353
                  %v355 = vld [vmem:[%s231 + $0x130] sm:$0xff]
                  %356 = vst [vmem:[%s232 + $0x108] sm:$0xff] %v355
                  %v357 = vld [vmem:[%s231 + $0x138] sm:$0xff]
                  %358 = vst [vmem:[%s232 + $0x110] sm:$0xff] %v357
                  %v359 = vld [vmem:[%s231 + $0x140] sm:$0xff]
                  %360 = vst [vmem:[%s232 + $0x118] sm:$0xff] %v359
                  %s361 = sadd.s32 1, %s230
                  %p362 = scmp.ge.s32.totalorder %s361, %s221
                  %s363 = scalar_select %p362, 0, %s361
                  %s364 = smul.u32 %s363, 256
                  %s365 = smul.u32 %s363, 256
                  %s366 = scalar_lea.vmem %s189, %s364
                  %s367 = scalar_lea.vmem %s179, %s365 [#allocation2]
                $region56: #{tfjs_spectrogram.1} parent=50 // loop_footer
                  %s227 = sadd.s32 %s225, 1
                $region57: #{tfjs_spectrogram.1} parent=50 // loop_footer_branch
                  %224 = sbr.rel target = $region53
                $region58: #{tfjs_spectrogram.1} parent=50 // loop_exit
                  _
                %s368 = sshrl.u32 %s220, 5
                %s369 = sand.u32 %s220, 31
                %s370 = smul.u32 %s368, 32
                %s371 = smul.u32 128, %s370
                %s372 = sshra.s32 %s371, 4
                %s373 = scalar_lea.vmem %s189, %s372
                %s374 = smul.u32 128, %s370
                %s375 = sshra.s32 %s374, 4
                %s376 = scalar_lea.vmem %s179, %s375 [#allocation2]
                // While loop
                $region59: #{tfjs_spectrogram.1} parent=50 // loop_pre_header
                  _
                $region60: #{tfjs_spectrogram.1} parent=50 // loop_header
                  %s380 = sphi 0, %s382
                  %p381 = scmp.ge.s32.totalorder %s380, %s369
                  %s385 = sphi 0, %s394
                  %s386 = sphi %s373, %s397
                  %s387 = sphi %s376, %s398
                $region61: #{tfjs_spectrogram.1} parent=50 // loop_header_branch
                  %384 = sbr.rel (%p381) target = $region65
                $region62: #{tfjs_spectrogram.1} parent=50 // loop_body
                  %v388 = vld [vmem:[%s386] sm:$0xff]
                  %389 = vst [vmem:[%s387] sm:$0xff] %v388
                  %v390 = vld [vmem:[%s386 + $0x48] sm:$0xff]
                  %391 = vst [vmem:[%s387 + $0x20] sm:$0xff] %v390
                  %s392 = sadd.s32 1, %s385
                  %p393 = scmp.ge.s32.totalorder %s392, %s369
                  %s394 = scalar_select %p393, 0, %s392
                  %s395 = smul.u32 %s394, 8
                  %s396 = smul.u32 %s394, 8
                  %s397 = scalar_lea.vmem %s373, %s395
                  %s398 = scalar_lea.vmem %s376, %s396 [#allocation2]
                $region63: #{tfjs_spectrogram.1} parent=50 // loop_footer
                  %s382 = sadd.s32 %s380, 1
                $region64: #{tfjs_spectrogram.1} parent=50 // loop_footer_branch
                  %379 = sbr.rel target = $region60
                $region65: #{tfjs_spectrogram.1} parent=50 // loop_exit
                  _
              $region51: #{tfjs_spectrogram.1} parent=35 // pred_fallthru
                _
              %p399 = pneg %p216
              // Predicated region
              $region66: #{tfjs_spectrogram.1} parent=35 // pred_check
                _
              $region67: #{tfjs_spectrogram.1} parent=35 // pred_check_branch
                %401 = sbr.rel (%p216) target = $region69
              $region68: #{tfjs_spectrogram.1} parent=35 // pred_region
                %s402 = sand.u32 %s190, 7
                %s403 = ssub.s32 %s190, %s402
                %s404 = scalar_lea.vmem %s189, %s403
                %s405 = ssub.s32 %s190, %s402
                %s406 = scalar_lea.vmem %s179, %s405 [#allocation2]
                %s407 = sshrl.u32 %s190, 3
                %s408 = sshrl.u32 %s407, 5
                // While loop
                $region70: #{tfjs_spectrogram.1} parent=68 // loop_pre_header
                  _
                $region71: #{tfjs_spectrogram.1} parent=68 // loop_header
                  %s412 = sphi 0, %s414
                  %p413 = scmp.ge.s32.totalorder %s412, %s408
                  %s417 = sphi 0, %s550
                  %s418 = sphi %s189, %s553
                  %s419 = sphi %s179, %s554
                $region72: #{tfjs_spectrogram.1} parent=68 // loop_header_branch
                  %416 = sbr.rel (%p413) target = $region76
                $region73: #{tfjs_spectrogram.1} parent=68 // loop_body
                  %v420 = vld [vmem:[%s418] sm:$0xff]
                  %421 = vst [vmem:[%s419] sm:$0xff] %v420
                  %v422 = vld [vmem:[%s418 + $0x8] sm:$0xff]
                  %423 = vst [vmem:[%s419 + $0x8] sm:$0xff] %v422
                  %v424 = vld [vmem:[%s418 + $0x10] sm:$0xff]
                  %425 = vst [vmem:[%s419 + $0x10] sm:$0xff] %v424
                  %v426 = vld [vmem:[%s418 + $0x18] sm:$0xff]
                  %427 = vst [vmem:[%s419 + $0x18] sm:$0xff] %v426
                  %v428 = vld [vmem:[%s418 + $0x20] sm:$0xff]
                  %429 = vst [vmem:[%s419 + $0x20] sm:$0xff] %v428
                  %v430 = vld [vmem:[%s418 + $0x28] sm:$0xff]
                  %431 = vst [vmem:[%s419 + $0x28] sm:$0xff] %v430
                  %v432 = vld [vmem:[%s418 + $0x30] sm:$0xff]
                  %433 = vst [vmem:[%s419 + $0x30] sm:$0xff] %v432
                  %v434 = vld [vmem:[%s418 + $0x38] sm:$0xff]
                  %435 = vst [vmem:[%s419 + $0x38] sm:$0xff] %v434
                  %v436 = vld [vmem:[%s418 + $0x40] sm:$0xff]
                  %437 = vst [vmem:[%s419 + $0x40] sm:$0xff] %v436
                  %v438 = vld [vmem:[%s418 + $0x48] sm:$0xff]
                  %439 = vst [vmem:[%s419 + $0x48] sm:$0xff] %v438
                  %v440 = vld [vmem:[%s418 + $0x50] sm:$0xff]
                  %441 = vst [vmem:[%s419 + $0x50] sm:$0xff] %v440
                  %v442 = vld [vmem:[%s418 + $0x58] sm:$0xff]
                  %443 = vst [vmem:[%s419 + $0x58] sm:$0xff] %v442
                  %v444 = vld [vmem:[%s418 + $0x60] sm:$0xff]
                  %445 = vst [vmem:[%s419 + $0x60] sm:$0xff] %v444
                  %v446 = vld [vmem:[%s418 + $0x68] sm:$0xff]
                  %447 = vst [vmem:[%s419 + $0x68] sm:$0xff] %v446
                  %v448 = vld [vmem:[%s418 + $0x70] sm:$0xff]
                  %449 = vst [vmem:[%s419 + $0x70] sm:$0xff] %v448
                  %v450 = vld [vmem:[%s418 + $0x78] sm:$0xff]
                  %451 = vst [vmem:[%s419 + $0x78] sm:$0xff] %v450
                  %v452 = vld [vmem:[%s418 + $0x80] sm:$0xff]
                  %453 = vst [vmem:[%s419 + $0x80] sm:$0xff] %v452
                  %v454 = vld [vmem:[%s418 + $0x88] sm:$0xff]
                  %455 = vst [vmem:[%s419 + $0x88] sm:$0xff] %v454
                  %v456 = vld [vmem:[%s418 + $0x90] sm:$0xff]
                  %457 = vst [vmem:[%s419 + $0x90] sm:$0xff] %v456
                  %v458 = vld [vmem:[%s418 + $0x98] sm:$0xff]
                  %459 = vst [vmem:[%s419 + $0x98] sm:$0xff] %v458
                  %v460 = vld [vmem:[%s418 + $0xa0] sm:$0xff]
                  %461 = vst [vmem:[%s419 + $0xa0] sm:$0xff] %v460
                  %v462 = vld [vmem:[%s418 + $0xa8] sm:$0xff]
                  %463 = vst [vmem:[%s419 + $0xa8] sm:$0xff] %v462
                  %v464 = vld [vmem:[%s418 + $0xb0] sm:$0xff]
                  %465 = vst [vmem:[%s419 + $0xb0] sm:$0xff] %v464
                  %v466 = vld [vmem:[%s418 + $0xb8] sm:$0xff]
                  %467 = vst [vmem:[%s419 + $0xb8] sm:$0xff] %v466
                  %v468 = vld [vmem:[%s418 + $0xc0] sm:$0xff]
                  %469 = vst [vmem:[%s419 + $0xc0] sm:$0xff] %v468
                  %v470 = vld [vmem:[%s418 + $0xc8] sm:$0xff]
                  %471 = vst [vmem:[%s419 + $0xc8] sm:$0xff] %v470
                  %v472 = vld [vmem:[%s418 + $0xd0] sm:$0xff]
                  %473 = vst [vmem:[%s419 + $0xd0] sm:$0xff] %v472
                  %v474 = vld [vmem:[%s418 + $0xd8] sm:$0xff]
                  %475 = vst [vmem:[%s419 + $0xd8] sm:$0xff] %v474
                  %v476 = vld [vmem:[%s418 + $0xe0] sm:$0xff]
                  %477 = vst [vmem:[%s419 + $0xe0] sm:$0xff] %v476
                  %v478 = vld [vmem:[%s418 + $0xe8] sm:$0xff]
                  %479 = vst [vmem:[%s419 + $0xe8] sm:$0xff] %v478
                  %v480 = vld [vmem:[%s418 + $0xf0] sm:$0xff]
                  %481 = vst [vmem:[%s419 + $0xf0] sm:$0xff] %v480
                  %v482 = vld [vmem:[%s418 + $0xf8] sm:$0xff]
                  %483 = vst [vmem:[%s419 + $0xf8] sm:$0xff] %v482
                  %v484 = vld [vmem:[%s418 + $0x48] sm:$0xff]
                  %485 = vst [vmem:[%s419 + $0x20] sm:$0xff] %v484
                  %v486 = vld [vmem:[%s418 + $0x50] sm:$0xff]
                  %487 = vst [vmem:[%s419 + $0x28] sm:$0xff] %v486
                  %v488 = vld [vmem:[%s418 + $0x58] sm:$0xff]
                  %489 = vst [vmem:[%s419 + $0x30] sm:$0xff] %v488
                  %v490 = vld [vmem:[%s418 + $0x60] sm:$0xff]
                  %491 = vst [vmem:[%s419 + $0x38] sm:$0xff] %v490
                  %v492 = vld [vmem:[%s418 + $0x68] sm:$0xff]
                  %493 = vst [vmem:[%s419 + $0x40] sm:$0xff] %v492
                  %v494 = vld [vmem:[%s418 + $0x70] sm:$0xff]
                  %495 = vst [vmem:[%s419 + $0x48] sm:$0xff] %v494
                  %v496 = vld [vmem:[%s418 + $0x78] sm:$0xff]
                  %497 = vst [vmem:[%s419 + $0x50] sm:$0xff] %v496
                  %v498 = vld [vmem:[%s418 + $0x80] sm:$0xff]
                  %499 = vst [vmem:[%s419 + $0x58] sm:$0xff] %v498
                  %v500 = vld [vmem:[%s418 + $0x88] sm:$0xff]
                  %501 = vst [vmem:[%s419 + $0x60] sm:$0xff] %v500
                  %v502 = vld [vmem:[%s418 + $0x90] sm:$0xff]
                  %503 = vst [vmem:[%s419 + $0x68] sm:$0xff] %v502
                  %v504 = vld [vmem:[%s418 + $0x98] sm:$0xff]
                  %505 = vst [vmem:[%s419 + $0x70] sm:$0xff] %v504
                  %v506 = vld [vmem:[%s418 + $0xa0] sm:$0xff]
                  %507 = vst [vmem:[%s419 + $0x78] sm:$0xff] %v506
                  %v508 = vld [vmem:[%s418 + $0xa8] sm:$0xff]
                  %509 = vst [vmem:[%s419 + $0x80] sm:$0xff] %v508
                  %v510 = vld [vmem:[%s418 + $0xb0] sm:$0xff]
                  %511 = vst [vmem:[%s419 + $0x88] sm:$0xff] %v510
                  %v512 = vld [vmem:[%s418 + $0xb8] sm:$0xff]
                  %513 = vst [vmem:[%s419 + $0x90] sm:$0xff] %v512
                  %v514 = vld [vmem:[%s418 + $0xc0] sm:$0xff]
                  %515 = vst [vmem:[%s419 + $0x98] sm:$0xff] %v514
                  %v516 = vld [vmem:[%s418 + $0xc8] sm:$0xff]
                  %517 = vst [vmem:[%s419 + $0xa0] sm:$0xff] %v516
                  %v518 = vld [vmem:[%s418 + $0xd0] sm:$0xff]
                  %519 = vst [vmem:[%s419 + $0xa8] sm:$0xff] %v518
                  %v520 = vld [vmem:[%s418 + $0xd8] sm:$0xff]
                  %521 = vst [vmem:[%s419 + $0xb0] sm:$0xff] %v520
                  %v522 = vld [vmem:[%s418 + $0xe0] sm:$0xff]
                  %523 = vst [vmem:[%s419 + $0xb8] sm:$0xff] %v522
                  %v524 = vld [vmem:[%s418 + $0xe8] sm:$0xff]
                  %525 = vst [vmem:[%s419 + $0xc0] sm:$0xff] %v524
                  %v526 = vld [vmem:[%s418 + $0xf0] sm:$0xff]
                  %527 = vst [vmem:[%s419 + $0xc8] sm:$0xff] %v526
                  %v528 = vld [vmem:[%s418 + $0xf8] sm:$0xff]
                  %529 = vst [vmem:[%s419 + $0xd0] sm:$0xff] %v528
                  %v530 = vld [vmem:[%s418 + $0x100] sm:$0xff]
                  %531 = vst [vmem:[%s419 + $0xd8] sm:$0xff] %v530
                  %v532 = vld [vmem:[%s418 + $0x108] sm:$0xff]
                  %533 = vst [vmem:[%s419 + $0xe0] sm:$0xff] %v532
                  %v534 = vld [vmem:[%s418 + $0x110] sm:$0xff]
                  %535 = vst [vmem:[%s419 + $0xe8] sm:$0xff] %v534
                  %v536 = vld [vmem:[%s418 + $0x118] sm:$0xff]
                  %537 = vst [vmem:[%s419 + $0xf0] sm:$0xff] %v536
                  %v538 = vld [vmem:[%s418 + $0x120] sm:$0xff]
                  %539 = vst [vmem:[%s419 + $0xf8] sm:$0xff] %v538
                  %v540 = vld [vmem:[%s418 + $0x128] sm:$0xff]
                  %541 = vst [vmem:[%s419 + $0x100] sm:$0xff] %v540
                  %v542 = vld [vmem:[%s418 + $0x130] sm:$0xff]
                  %543 = vst [vmem:[%s419 + $0x108] sm:$0xff] %v542
                  %v544 = vld [vmem:[%s418 + $0x138] sm:$0xff]
                  %545 = vst [vmem:[%s419 + $0x110] sm:$0xff] %v544
                  %v546 = vld [vmem:[%s418 + $0x140] sm:$0xff]
                  %547 = vst [vmem:[%s419 + $0x118] sm:$0xff] %v546
                  %s548 = sadd.s32 1, %s417
                  %p549 = scmp.ge.s32.totalorder %s548, %s408
                  %s550 = scalar_select %p549, 0, %s548
                  %s551 = smul.u32 %s550, 256
                  %s552 = smul.u32 %s550, 256
                  %s553 = scalar_lea.vmem %s189, %s551
                  %s554 = scalar_lea.vmem %s179, %s552 [#allocation2]
                $region74: #{tfjs_spectrogram.1} parent=68 // loop_footer
                  %s414 = sadd.s32 %s412, 1
                $region75: #{tfjs_spectrogram.1} parent=68 // loop_footer_branch
                  %411 = sbr.rel target = $region71
                $region76: #{tfjs_spectrogram.1} parent=68 // loop_exit
                  _
                %s555 = sshrl.u32 %s407, 5
                %s556 = sand.u32 %s407, 31
                %s557 = smul.u32 %s555, 32
                %s558 = smul.u32 128, %s557
                %s559 = sshra.s32 %s558, 4
                %s560 = scalar_lea.vmem %s189, %s559
                %s561 = smul.u32 128, %s557
                %s562 = sshra.s32 %s561, 4
                %s563 = scalar_lea.vmem %s179, %s562 [#allocation2]
                // While loop
                $region77: #{tfjs_spectrogram.1} parent=68 // loop_pre_header
                  _
                $region78: #{tfjs_spectrogram.1} parent=68 // loop_header
                  %s567 = sphi 0, %s569
                  %p568 = scmp.ge.s32.totalorder %s567, %s556
                  %s572 = sphi 0, %s581
                  %s573 = sphi %s560, %s584
                  %s574 = sphi %s563, %s585
                $region79: #{tfjs_spectrogram.1} parent=68 // loop_header_branch
                  %571 = sbr.rel (%p568) target = $region83
                $region80: #{tfjs_spectrogram.1} parent=68 // loop_body
                  %v575 = vld [vmem:[%s573] sm:$0xff]
                  %576 = vst [vmem:[%s574] sm:$0xff] %v575
                  %v577 = vld [vmem:[%s573 + $0x48] sm:$0xff]
                  %578 = vst [vmem:[%s574 + $0x20] sm:$0xff] %v577
                  %s579 = sadd.s32 1, %s572
                  %p580 = scmp.ge.s32.totalorder %s579, %s556
                  %s581 = scalar_select %p580, 0, %s579
                  %s582 = smul.u32 %s581, 8
                  %s583 = smul.u32 %s581, 8
                  %s584 = scalar_lea.vmem %s560, %s582
                  %s585 = scalar_lea.vmem %s563, %s583 [#allocation2]
                $region81: #{tfjs_spectrogram.1} parent=68 // loop_footer
                  %s569 = sadd.s32 %s567, 1
                $region82: #{tfjs_spectrogram.1} parent=68 // loop_footer_branch
                  %566 = sbr.rel target = $region78
                $region83: #{tfjs_spectrogram.1} parent=68 // loop_exit
                  _
                %s586 = sshll.u32 1, %s402
                %s587 = ssub.s32 %s586, 1
                loop: start=0, step=1, limit=1
                $region84: #{tfjs_spectrogram.1} parent=68 // loop_pre_header
                  _
                $region85: #{tfjs_spectrogram.1} parent=68 // loop_header
                  %s589 = sphi 0, %s593
                  %p590 = scmp.ge.s32.totalorder %s589, 1
                  %s594 = sphi %s404, %s404
                  %s595 = sphi %s406, %s406
                $region86: #{tfjs_spectrogram.1} parent=68 // loop_header_branch
                  %592 = sbr.rel (%p590) target = $region90
                $region87: #{tfjs_spectrogram.1} parent=68 // loop_body
                  %v596 = vld [vmem:[%s594] sm:%s587]
                  %597 = vst [vmem:[%s595] sm:%s587] %v596
                  %v598 = vld [vmem:[%s594 + $0x48] sm:%s587]
                  %599 = vst [vmem:[%s595 + $0x20] sm:%s587] %v598
                $region88: #{tfjs_spectrogram.1} parent=68 // loop_footer
                  %s593 = sadd.s32 1, %s589
                $region89: #{tfjs_spectrogram.1} parent=68 // loop_footer_branch
                  %588 = sbr.rel target = $region85
                $region90: #{tfjs_spectrogram.1} parent=68 // loop_exit
                  _
              $region69: #{tfjs_spectrogram.1} parent=35 // pred_fallthru
                _
            $region36: #{tfjs_spectrogram.1} parent=31 // pred_fallthru
              _
            // Predicated region
            $region37: #{tfjs_spectrogram.1} parent=31 // pred_check
              %p198 = pneg %p194
            $region38: #{tfjs_spectrogram.1} parent=31 // pred_check_branch
              %200 = sbr.rel (%p198) target = $region40
            $region39: #{tfjs_spectrogram.1} parent=31 // pred_region
              %s201 = sshll.u32 1, %s190
              %s202 = ssub.s32 %s201, 1
              loop: start=0, step=1, limit=1
              $region41: #{tfjs_spectrogram.1} parent=39 // loop_pre_header
                _
              $region42: #{tfjs_spectrogram.1} parent=39 // loop_header
                %s204 = sphi 0, %s208
                %p205 = scmp.ge.s32.totalorder %s204, 1
                %s209 = sphi %s189, %s189
                %s210 = sphi %s179, %s179
              $region43: #{tfjs_spectrogram.1} parent=39 // loop_header_branch
                %207 = sbr.rel (%p205) target = $region47
              $region44: #{tfjs_spectrogram.1} parent=39 // loop_body
                %v211 = vld [vmem:[%s209] sm:%s202]
                %212 = vst [vmem:[%s210] sm:%s202] %v211
                %v213 = vld [vmem:[%s209 + $0x48] sm:%s202]
                %214 = vst [vmem:[%s210 + $0x20] sm:%s202] %v213
              $region45: #{tfjs_spectrogram.1} parent=39 // loop_footer
                %s208 = sadd.s32 1, %s204
              $region46: #{tfjs_spectrogram.1} parent=39 // loop_footer_branch
                %203 = sbr.rel target = $region42
              $region47: #{tfjs_spectrogram.1} parent=39 // loop_exit
                _
            $region40: #{tfjs_spectrogram.1} parent=31 // pred_fallthru
              _
          $region32: #{tfjs_spectrogram.1} parent=27 // pred_fallthru
            _
          %600 = vnop
        $region28: #{tfjs_spectrogram.1} parent=23 // pred_fallthru
          _
        // Predicated region
        $region91: #{tfjs_spectrogram.1} parent=23 // pred_check
          %p601 = pneg %p72
        $region92: #{tfjs_spectrogram.1} parent=23 // pred_check_branch
          %603 = sbr.rel (%p601) target = $region94
        $region93: #{tfjs_spectrogram.1} parent=23 // pred_region
          %p604 = scmp.lt.s32.totalorder %s17, 1
          %s605 = scalar_select %p604, %s17, 1
          %p606 = scmp.lt.s32.totalorder %s18, 1
          %s607 = scalar_select %p606, %s18, 1
          %s608 = smul.addr %s607, 2
          %s609 = smul.addr %s605, 4
          %s610 = sadd.s32 %s608, %s609
          %s611 = smul.addr %s610, 8
          %s612 = scalar_lea.vmem %s1, %s611
        $region94: #{tfjs_spectrogram.1} parent=23 // pred_fallthru
          _
      $region24: #{tfjs_spectrogram.1} parent=5 // pred_fallthru
        _
      %p613 = scmp.le.s32.totalorder 1, %s10
      %p614 = scmp.lt.s32.totalorder %s10, 5
      %p615 = pnand %p613, %p614
      %p616 = pneg %p615
      // Predicated region
      $region95: #{tfjs_spectrogram.1} parent=5 // pred_check
        _
      $region96: #{tfjs_spectrogram.1} parent=5 // pred_check_branch
        %618 = sbr.rel (%p615) target = $region98
      $region97: #{tfjs_spectrogram.1} parent=5 // pred_region
        %s619 = ssub.s32 %s10, 1
        %s620 = sand.u32 %s37, 1
        %s621 = sand.u32 %s37, 1
        %s622 = smul.addr %s621, 64
        %s623 = scalar_lea.vmem [#allocation2], %s622
        // Predicated region
        $region99: #{tfjs_spectrogram.1} parent=97 // pred_check
          %p624 = pneg %p50
        $region100: #{tfjs_spectrogram.1} parent=97 // pred_check_branch
          %626 = sbr.rel (%p624) target = $region102
        $region101: #{tfjs_spectrogram.1} parent=97 // pred_region
          _
        $region102: #{tfjs_spectrogram.1} parent=97 // pred_fallthru
          _
        %s627 = sand.u32 %s37, 1
        %s628 = sand.u32 %s37, 1
        %s629 = smul.addr %s628, 64
        %s630 = scalar_lea.vmem [#allocation2], %s629
        %p631 = pneg %p50
        %p632 = pneg %p47
        %p633 = scmp.lt.s32.totalorder %s19, 1
        %s634 = scalar_select %p633, %s19, 1
        %p635 = scmp.lt.s32.totalorder %s20, 1
        %s636 = scalar_select %p635, %s20, 1
        %s637 = smul.addr %s636, 2
        %s638 = smul.addr %s634, 4
        %s639 = sadd.s32 %s637, %s638
        %s640 = smul.addr %s639, 8
        %s641 = scalar_lea.vmem %s1, %s640
        %p642 = pneg %p78
        %p643 = pneg %p75
        %p644 = pneg %p99
        %p645 = pneg %p96
        %p646 = pneg %p120
        %p647 = pneg %p117
        %p648 = pneg %p148
        %p649 = pneg %p145
        %s650 = sand.u32 %s135, 1
        %s651 = sand.u32 %s135, 1
        %s652 = smul.addr %s651, 96
        %s653 = scalar_lea.vmem [#allocation3], %s652
        %s654 = smul.u32 4, %s20
        %s655 = ssub.s32 9, %s654
        %p656 = scmp.lt.s32.totalorder %s655, 4
        %s657 = scalar_select %p656, %s655, 4
        %s658 = smul.u32 256, %s657
        %p659 = scmp.lt.s32.totalorder %s19, 1
        %s660 = scalar_select %p659, %s19, 1
        %p661 = scmp.lt.s32.totalorder %s20, 1
        %s662 = scalar_select %p661, %s20, 1
        %s663 = smul.addr %s662, 2
        %s664 = smul.addr %s660, 4
        %s665 = sadd.s32 %s663, %s664
        %s666 = smul.addr %s665, 8
        %s667 = scalar_lea.vmem %s1, %s666
        %s668 = smul.u32 4, %s20
        %v669 = vld [vmem:[%s623] sm:$0xff]
        %v670 = vld [vmem:[%s623 + $0x8] sm:$0xff]
        %v671 = vld [vmem:[%s623 + $0x10] sm:$0xff]
        %v672 = vld [vmem:[%s623 + $0x18] sm:$0xff]
        %v673 = vld [vmem:[%s623 + $0x20] sm:$0xff]
        %v674 = vld [vmem:[%s623 + $0x28] sm:$0xff]
        %v675 = vld [vmem:[%s623 + $0x30] sm:$0xff]
        %v676 = vld [vmem:[%s623 + $0x38] sm:$0xff]
        %v677 = vld [vmem:[%s667] sm:$0xff]
        %v678 = vld [vmem:[%s667 + $0x8] sm:$0xff]
        %679 = vrot.lane.b32.xlu0 %v669, 127
        %v680 = vpop.permute.xlu0 %679
        %681 = vrot.lane.b32.xlu0 %v673, 127
        %v682 = vpop.permute.xlu0 %681
        %683 = vrot.lane.b32.xlu0 %v670, 127
        %v684 = vpop.permute.xlu0 %683
        %685 = vrot.lane.b32.xlu0 %v674, 127
        %v686 = vpop.permute.xlu0 %685
        %687 = vrot.lane.b32.xlu0 %v671, 127
        %v688 = vpop.permute.xlu0 %687
        %689 = vrot.lane.b32.xlu0 %v675, 127
        %v690 = vpop.permute.xlu0 %689
        %691 = vrot.lane.b32.xlu0 %v672, 127
        %v692 = vpop.permute.xlu0 %691
        %693 = vrot.lane.b32.xlu0 %v676, 127
        %v694 = vpop.permute.xlu0 %693
        %v695 = vlaneseq
        %v696 = vand.u32 %v695, 127
        %vm697 = vcmp.lt.s32.totalorder %v696, 127
        %v698 = vsel %vm697, %v688, %v692
        %v699 = vsel %vm697, %v690, %v694
        %v700 = vsel %vm697, %v684, %v688
        %v701 = vsel %vm697, %v686, %v690
        %v702 = vsel %vm697, %v680, %v684
        %v703 = vsel %vm697, %v682, %v686
        %v704 = vsel %vm697, %v692, %v680
        %v705 = vsel %vm697, %v694, %v682
        %v706 = vadd.s32 %v696, 128
        %v707 = vadd.s32 %v696, 256
        %v708 = vadd.s32 %v696, 384
        %vm709 = vcmp.eq.s32.totalorder %v696, 511
        %vm710 = vcmp.eq.s32.totalorder %v706, 511
        %vm711 = vcmp.eq.s32.totalorder %v707, 511
        %vm712 = vcmp.eq.s32.totalorder %v708, 511
        %714 = vset.pattern.permute.xlu0 0
        %715 = vperm.xlu0 %714, %v677
        %v716 = vpop.permute.xlu0 %715
        %719 = vset.pattern.permute.xlu0 0
        %720 = vperm.xlu0 %719, %v678
        %v721 = vpop.permute.xlu0 %720
        %v723 = vsel %vm709, %v716, %v702
        %v724 = vsel %vm710, %v716, %v700
        %v725 = vsel %vm711, %v716, %v698
        %v726 = vsel %vm712, %v716, %v704
        %v727 = vsel %vm709, %v721, %v703
        %v728 = vsel %vm710, %v721, %v701
        %v729 = vsel %vm711, %v721, %v699
        %v730 = vsel %vm712, %v721, %v705
        %v731 = vld [vmem:[%s2] sm:$0xff]
        %v732 = vld [vmem:[%s2 + $0x8] sm:$0xff]
        %v733 = vld [vmem:[%s2 + $0x10] sm:$0xff]
        %v734 = vld [vmem:[%s2 + $0x18] sm:$0xff]
        %v735 = vld [vmem:[%s2 + $0x20] sm:$0xff]
        %v736 = vld [vmem:[%s2 + $0x28] sm:$0xff]
        %v737 = vld [vmem:[%s3] sm:$0xff]
        %v738 = vld [vmem:[%s3 + $0x8] sm:$0xff]
        %v739 = vld [vmem:[%s3 + $0x10] sm:$0xff]
        %v740 = vld [vmem:[%s3 + $0x18] sm:$0xff]
        %v741 = vld [vmem:[%s3 + $0x20] sm:$0xff]
        %v742 = vld [vmem:[%s3 + $0x28] sm:$0xff]
        %vm743 = vcmask 130048
        %v745 = vsel %vm743, %v737, 0
        %v748 = vsel %vm743, %v738, 0
        %v751 = vsel %vm743, %v739, 0
        %v754 = vsel %vm743, %v740, 0
        %v757 = vsel %vm743, %v741, 0
        %v760 = vsel %vm743, %v742, 0
        %762 = vmatprep.subr.mxu0 0.0
        %763 = vmatpush1.msra.mxu0 0.0
        %764 = vmatprep.subr.mxu0 0.0
        %765 = vmatpush1.msra.mxu0 0.0
        %766 = vmatprep.subr.mxu0 0.0
        %767 = vmatpush1.msra.mxu0 0.0
        %768 = vmatprep.subr.mxu0 0.0
        %769 = vmatpush1.msra.mxu0 0.0
        %770 = vmatprep.subr.mxu0 0.0
        %771 = vmatpush1.msra.mxu0 0.0
        %772 = vmatprep.subr.mxu0 0.0
        %773 = vmatpush1.msra.mxu0 0.0
        %774 = vmatprep.subr.mxu0 0.0
        %775 = vmatpush1.msra.mxu0 0.0
        %776 = vmatprep.subr.mxu0 0.0
        %777 = vmatpush1.msra.mxu0 0.0
        %778 = vmatprep.subr.mxu0 0.0
        %779 = vmatpush1.msra.mxu0 0.0
        %780 = vmatprep.subr.mxu0 0.0
        %781 = vmatpush1.msra.mxu0 0.0
        %782 = vmatprep.subr.mxu0 0.0
        %783 = vmatpush1.msra.mxu0 0.0
        %784 = vmatprep.subr.mxu0 0.0
        %785 = vmatpush1.msra.mxu0 0.0
        %786 = vmatprep.subr.mxu0 0.0
        %787 = vmatpush1.msra.mxu0 0.0
        %788 = vmatprep.subr.mxu0 0.0
        %789 = vmatpush1.msra.mxu0 0.0
        %790 = vmatprep.subr.mxu0 %v728
        %791 = vmatpush1.msra.mxu0 %v727
        %792 = vmatprep.subr.mxu0 %v724
        %793 = vmatpush1.msra.mxu0 %v723
        %794 = vmatprep.subr.mxu0 0.0
        %795 = vmatpush2.msra.mxu0 0.0
        %796 = vmatprep.subr.mxu0 0.0
        %797 = vmatpush2.msra.mxu0 0.0
        %798 = vmatprep.subr.mxu0 0.0
        %799 = vmatpush2.msra.mxu0 0.0
        %800 = vmatprep.subr.mxu0 0.0
        %801 = vmatpush2.msra.mxu0 0.0
        %802 = vmatprep.subr.mxu0 0.0
        %803 = vmatpush2.msra.mxu0 0.0
        %804 = vmatprep.subr.mxu0 0.0
        %805 = vmatpush2.msra.mxu0 0.0
        %806 = vmatprep.subr.mxu0 0.0
        %807 = vmatpush2.msra.mxu0 0.0
        %808 = vmatprep.subr.mxu0 0.0
        %809 = vmatpush2.msra.mxu0 0.0
        %810 = vmatprep.subr.mxu0 0.0
        %811 = vmatpush2.msra.mxu0 0.0
        %812 = vmatprep.subr.mxu0 0.0
        %813 = vmatpush2.msra.mxu0 0.0
        %814 = vmatprep.subr.mxu0 0.0
        %815 = vmatpush2.msra.mxu0 0.0
        %816 = vmatprep.subr.mxu0 0.0
        %817 = vmatpush2.msra.mxu0 0.0
        %818 = vmatprep.subr.mxu0 0.0
        %819 = vmatpush2.msra.mxu0 0.0
        %820 = vmatprep.subr.mxu0 0.0
        %821 = vmatpush2.msra.mxu0 0.0
        %822 = vmatprep.subr.mxu0 0.0
        %823 = vmatpush2.msra.mxu0 0.0
        %824 = vmatprep.subr.mxu0 0.0
        %825 = vmatpush2.msra.mxu0 0.0
        %826 = vmatprep.mubr.f32.mxu0 0.0
        %827 = vmatmul.mubr.f32.gmra.mxu0 %v745
        %v828 = vpop.f32.mrf.mxu0
        %v829 = vadd.f32 0.0, %v828
        %v830 = vpop.f32.mrf.mxu0
        %v831 = vadd.f32 0.0, %v830
        %832 = vmatprep.mubr.f32.mxu0 0.0
        %833 = vmatmul.mubr.f32.gmra.mxu0 %v748
        %v834 = vpop.f32.mrf.mxu0
        %v835 = vadd.f32 0.0, %v834
        %v836 = vpop.f32.mrf.mxu0
        %v837 = vadd.f32 0.0, %v836
        %838 = vmatprep.mubr.f32.mxu0 0.0
        %839 = vmatmul.mubr.f32.gmra.mxu0 %v751
        %v840 = vpop.f32.mrf.mxu0
        %v841 = vadd.f32 0.0, %v840
        %v842 = vpop.f32.mrf.mxu0
        %v843 = vadd.f32 0.0, %v842
        %844 = vmatprep.mubr.f32.mxu0 0.0
        %845 = vmatmul.mubr.f32.gmra.mxu0 %v754
        %v846 = vpop.f32.mrf.mxu0
        %v847 = vadd.f32 0.0, %v846
        %v848 = vpop.f32.mrf.mxu0
        %v849 = vadd.f32 0.0, %v848
        %850 = vmatprep.mubr.f32.mxu0 0.0
        %851 = vmatmul.mubr.f32.gmra.mxu0 %v757
        %v852 = vpop.f32.mrf.mxu0
        %v853 = vadd.f32 0.0, %v852
        %v854 = vpop.f32.mrf.mxu0
        %v855 = vadd.f32 0.0, %v854
        %856 = vmatprep.mubr.f32.mxu0 0.0
        %857 = vmatmul.mubr.f32.gmra.mxu0 %v760
        %v858 = vpop.f32.mrf.mxu0
        %v859 = vadd.f32 0.0, %v858
        %v860 = vpop.f32.mrf.mxu0
        %v861 = vadd.f32 0.0, %v860
        %862 = vdwg.mxu0
        %863 = vmatprep.subr.mxu0 0.0
        %864 = vmatpush1.msra.mxu0 0.0
        %865 = vmatprep.subr.mxu0 0.0
        %866 = vmatpush1.msra.mxu0 0.0
        %867 = vmatprep.subr.mxu0 0.0
        %868 = vmatpush1.msra.mxu0 0.0
        %869 = vmatprep.subr.mxu0 0.0
        %870 = vmatpush1.msra.mxu0 0.0
        %871 = vmatprep.subr.mxu0 0.0
        %872 = vmatpush1.msra.mxu0 0.0
        %873 = vmatprep.subr.mxu0 0.0
        %874 = vmatpush1.msra.mxu0 0.0
        %875 = vmatprep.subr.mxu0 0.0
        %876 = vmatpush1.msra.mxu0 0.0
        %877 = vmatprep.subr.mxu0 0.0
        %878 = vmatpush1.msra.mxu0 0.0
        %879 = vmatprep.subr.mxu0 0.0
        %880 = vmatpush1.msra.mxu0 0.0
        %881 = vmatprep.subr.mxu0 0.0
        %882 = vmatpush1.msra.mxu0 0.0
        %883 = vmatprep.subr.mxu0 0.0
        %884 = vmatpush1.msra.mxu0 0.0
        %885 = vmatprep.subr.mxu0 0.0
        %886 = vmatpush1.msra.mxu0 0.0
        %887 = vmatprep.subr.mxu0 0.0
        %888 = vmatpush1.msra.mxu0 0.0
        %889 = vmatprep.subr.mxu0 0.0
        %890 = vmatpush1.msra.mxu0 0.0
        %891 = vmatprep.subr.mxu0 %v730
        %892 = vmatpush1.msra.mxu0 %v729
        %893 = vmatprep.subr.mxu0 %v726
        %894 = vmatpush1.msra.mxu0 %v725
        %895 = vmatprep.subr.mxu0 0.0
        %896 = vmatpush2.msra.mxu0 0.0
        %897 = vmatprep.subr.mxu0 0.0
        %898 = vmatpush2.msra.mxu0 0.0
        %899 = vmatprep.subr.mxu0 0.0
        %900 = vmatpush2.msra.mxu0 0.0
        %901 = vmatprep.subr.mxu0 0.0
        %902 = vmatpush2.msra.mxu0 0.0
        %903 = vmatprep.subr.mxu0 0.0
        %904 = vmatpush2.msra.mxu0 0.0
        %905 = vmatprep.subr.mxu0 0.0
        %906 = vmatpush2.msra.mxu0 0.0
        %907 = vmatprep.subr.mxu0 0.0
        %908 = vmatpush2.msra.mxu0 0.0
        %909 = vmatprep.subr.mxu0 0.0
        %910 = vmatpush2.msra.mxu0 0.0
        %911 = vmatprep.subr.mxu0 0.0
        %912 = vmatpush2.msra.mxu0 0.0
        %913 = vmatprep.subr.mxu0 0.0
        %914 = vmatpush2.msra.mxu0 0.0
        %915 = vmatprep.subr.mxu0 0.0
        %916 = vmatpush2.msra.mxu0 0.0
        %917 = vmatprep.subr.mxu0 0.0
        %918 = vmatpush2.msra.mxu0 0.0
        %919 = vmatprep.subr.mxu0 0.0
        %920 = vmatpush2.msra.mxu0 0.0
        %921 = vmatprep.subr.mxu0 0.0
        %922 = vmatpush2.msra.mxu0 0.0
        %923 = vmatprep.subr.mxu0 0.0
        %924 = vmatpush2.msra.mxu0 0.0
        %925 = vmatprep.subr.mxu0 0.0
        %926 = vmatpush2.msra.mxu0 0.0
        %927 = vmatprep.mubr.f32.mxu0 0.0
        %928 = vmatmul.mubr.f32.gmra.mxu0 %v745
        %v929 = vpop.f32.mrf.mxu0
        %v930 = vadd.f32 0.0, %v929
        %v931 = vpop.f32.mrf.mxu0
        %v932 = vadd.f32 0.0, %v931
        %933 = vmatprep.mubr.f32.mxu0 0.0
        %934 = vmatmul.mubr.f32.gmra.mxu0 %v748
        %v935 = vpop.f32.mrf.mxu0
        %v936 = vadd.f32 0.0, %v935
        %v937 = vpop.f32.mrf.mxu0
        %v938 = vadd.f32 0.0, %v937
        %939 = vmatprep.mubr.f32.mxu0 0.0
        %940 = vmatmul.mubr.f32.gmra.mxu0 %v751
        %v941 = vpop.f32.mrf.mxu0
        %v942 = vadd.f32 0.0, %v941
        %v943 = vpop.f32.mrf.mxu0
        %v944 = vadd.f32 0.0, %v943
        %945 = vmatprep.mubr.f32.mxu0 0.0
        %946 = vmatmul.mubr.f32.gmra.mxu0 %v754
        %v947 = vpop.f32.mrf.mxu0
        %v948 = vadd.f32 0.0, %v947
        %v949 = vpop.f32.mrf.mxu0
        %v950 = vadd.f32 0.0, %v949
        %951 = vmatprep.mubr.f32.mxu0 0.0
        %952 = vmatmul.mubr.f32.gmra.mxu0 %v757
        %v953 = vpop.f32.mrf.mxu0
        %v954 = vadd.f32 0.0, %v953
        %v955 = vpop.f32.mrf.mxu0
        %v956 = vadd.f32 0.0, %v955
        %957 = vmatprep.mubr.f32.mxu0 0.0
        %958 = vmatmul.mubr.f32.gmra.mxu0 %v760
        %v959 = vpop.f32.mrf.mxu0
        %v960 = vadd.f32 0.0, %v959
        %v961 = vpop.f32.mrf.mxu0
        %v962 = vadd.f32 0.0, %v961
        %963 = vdwg.mxu0
        %v965 = vsel %vm743, %v731, 0
        %v968 = vsel %vm743, %v732, 0
        %v971 = vsel %vm743, %v733, 0
        %v974 = vsel %vm743, %v734, 0
        %v977 = vsel %vm743, %v735, 0
        %v980 = vsel %vm743, %v736, 0
        %982 = vmatprep.subr.mxu0 0.0
        %983 = vmatpush1.msra.mxu0 0.0
        %984 = vmatprep.subr.mxu0 0.0
        %985 = vmatpush1.msra.mxu0 0.0
        %986 = vmatprep.subr.mxu0 0.0
        %987 = vmatpush1.msra.mxu0 0.0
        %988 = vmatprep.subr.mxu0 0.0
        %989 = vmatpush1.msra.mxu0 0.0
        %990 = vmatprep.subr.mxu0 0.0
        %991 = vmatpush1.msra.mxu0 0.0
        %992 = vmatprep.subr.mxu0 0.0
        %993 = vmatpush1.msra.mxu0 0.0
        %994 = vmatprep.subr.mxu0 0.0
        %995 = vmatpush1.msra.mxu0 0.0
        %996 = vmatprep.subr.mxu0 0.0
        %997 = vmatpush1.msra.mxu0 0.0
        %998 = vmatprep.subr.mxu0 0.0
        %999 = vmatpush1.msra.mxu0 0.0
        %1000 = vmatprep.subr.mxu0 0.0
        %1001 = vmatpush1.msra.mxu0 0.0
        %1002 = vmatprep.subr.mxu0 0.0
        %1003 = vmatpush1.msra.mxu0 0.0
        %1004 = vmatprep.subr.mxu0 0.0
        %1005 = vmatpush1.msra.mxu0 0.0
        %1006 = vmatprep.subr.mxu0 0.0
        %1007 = vmatpush1.msra.mxu0 0.0
        %1008 = vmatprep.subr.mxu0 0.0
        %1009 = vmatpush1.msra.mxu0 0.0
        %1010 = vmatprep.subr.mxu0 %v674
        %1011 = vmatpush1.msra.mxu0 %v673
        %1012 = vmatprep.subr.mxu0 %v670
        %1013 = vmatpush1.msra.mxu0 %v669
        %1014 = vmatprep.subr.mxu0 0.0
        %1015 = vmatpush2.msra.mxu0 0.0
        %1016 = vmatprep.subr.mxu0 0.0
        %1017 = vmatpush2.msra.mxu0 0.0
        %1018 = vmatprep.subr.mxu0 0.0
        %1019 = vmatpush2.msra.mxu0 0.0
        %1020 = vmatprep.subr.mxu0 0.0
        %1021 = vmatpush2.msra.mxu0 0.0
        %1022 = vmatprep.subr.mxu0 0.0
        %1023 = vmatpush2.msra.mxu0 0.0
        %1024 = vmatprep.subr.mxu0 0.0
        %1025 = vmatpush2.msra.mxu0 0.0
        %1026 = vmatprep.subr.mxu0 0.0
        %1027 = vmatpush2.msra.mxu0 0.0
        %1028 = vmatprep.subr.mxu0 0.0
        %1029 = vmatpush2.msra.mxu0 0.0
        %1030 = vmatprep.subr.mxu0 0.0
        %1031 = vmatpush2.msra.mxu0 0.0
        %1032 = vmatprep.subr.mxu0 0.0
        %1033 = vmatpush2.msra.mxu0 0.0
        %1034 = vmatprep.subr.mxu0 0.0
        %1035 = vmatpush2.msra.mxu0 0.0
        %1036 = vmatprep.subr.mxu0 0.0
        %1037 = vmatpush2.msra.mxu0 0.0
        %1038 = vmatprep.subr.mxu0 0.0
        %1039 = vmatpush2.msra.mxu0 0.0
        %1040 = vmatprep.subr.mxu0 0.0
        %1041 = vmatpush2.msra.mxu0 0.0
        %1042 = vmatprep.subr.mxu0 0.0
        %1043 = vmatpush2.msra.mxu0 0.0
        %1044 = vmatprep.subr.mxu0 0.0
        %1045 = vmatpush2.msra.mxu0 0.0
        %1046 = vmatprep.mubr.f32.mxu0 0.0
        %1047 = vmatmul.mubr.f32.gmra.mxu0 %v965
        %v1048 = vpop.f32.mrf.mxu0
        %v1049 = vadd.f32 %v829, %v1048
        %v1050 = vpop.f32.mrf.mxu0
        %v1051 = vadd.f32 %v831, %v1050
        %1052 = vmatprep.mubr.f32.mxu0 0.0
        %1053 = vmatmul.mubr.f32.gmra.mxu0 %v968
        %v1054 = vpop.f32.mrf.mxu0
        %v1055 = vadd.f32 %v835, %v1054
        %v1056 = vpop.f32.mrf.mxu0
        %v1057 = vadd.f32 %v837, %v1056
        %1058 = vmatprep.mubr.f32.mxu0 0.0
        %1059 = vmatmul.mubr.f32.gmra.mxu0 %v971
        %v1060 = vpop.f32.mrf.mxu0
        %v1061 = vadd.f32 %v841, %v1060
        %v1062 = vpop.f32.mrf.mxu0
        %v1063 = vadd.f32 %v843, %v1062
        %1064 = vmatprep.mubr.f32.mxu0 0.0
        %1065 = vmatmul.mubr.f32.gmra.mxu0 %v974
        %v1066 = vpop.f32.mrf.mxu0
        %v1067 = vadd.f32 %v847, %v1066
        %v1068 = vpop.f32.mrf.mxu0
        %v1069 = vadd.f32 %v849, %v1068
        %1070 = vmatprep.mubr.f32.mxu0 0.0
        %1071 = vmatmul.mubr.f32.gmra.mxu0 %v977
        %v1072 = vpop.f32.mrf.mxu0
        %v1073 = vadd.f32 %v853, %v1072
        %v1074 = vpop.f32.mrf.mxu0
        %v1075 = vadd.f32 %v855, %v1074
        %1076 = vmatprep.mubr.f32.mxu0 0.0
        %1077 = vmatmul.mubr.f32.gmra.mxu0 %v980
        %v1078 = vpop.f32.mrf.mxu0
        %v1079 = vadd.f32 %v859, %v1078
        %v1080 = vpop.f32.mrf.mxu0
        %v1081 = vadd.f32 %v861, %v1080
        %1082 = vdwg.mxu0
        %1083 = vmatprep.subr.mxu0 0.0
        %1084 = vmatpush1.msra.mxu0 0.0
        %1085 = vmatprep.subr.mxu0 0.0
        %1086 = vmatpush1.msra.mxu0 0.0
        %1087 = vmatprep.subr.mxu0 0.0
        %1088 = vmatpush1.msra.mxu0 0.0
        %1089 = vmatprep.subr.mxu0 0.0
        %1090 = vmatpush1.msra.mxu0 0.0
        %1091 = vmatprep.subr.mxu0 0.0
        %1092 = vmatpush1.msra.mxu0 0.0
        %1093 = vmatprep.subr.mxu0 0.0
        %1094 = vmatpush1.msra.mxu0 0.0
        %1095 = vmatprep.subr.mxu0 0.0
        %1096 = vmatpush1.msra.mxu0 0.0
        %1097 = vmatprep.subr.mxu0 0.0
        %1098 = vmatpush1.msra.mxu0 0.0
        %1099 = vmatprep.subr.mxu0 0.0
        %1100 = vmatpush1.msra.mxu0 0.0
        %1101 = vmatprep.subr.mxu0 0.0
        %1102 = vmatpush1.msra.mxu0 0.0
        %1103 = vmatprep.subr.mxu0 0.0
        %1104 = vmatpush1.msra.mxu0 0.0
        %1105 = vmatprep.subr.mxu0 0.0
        %1106 = vmatpush1.msra.mxu0 0.0
        %1107 = vmatprep.subr.mxu0 0.0
        %1108 = vmatpush1.msra.mxu0 0.0
        %1109 = vmatprep.subr.mxu0 0.0
        %1110 = vmatpush1.msra.mxu0 0.0
        %1111 = vmatprep.subr.mxu0 %v676
        %1112 = vmatpush1.msra.mxu0 %v675
        %1113 = vmatprep.subr.mxu0 %v672
        %1114 = vmatpush1.msra.mxu0 %v671
        %1115 = vmatprep.subr.mxu0 0.0
        %1116 = vmatpush2.msra.mxu0 0.0
        %1117 = vmatprep.subr.mxu0 0.0
        %1118 = vmatpush2.msra.mxu0 0.0
        %1119 = vmatprep.subr.mxu0 0.0
        %1120 = vmatpush2.msra.mxu0 0.0
        %1121 = vmatprep.subr.mxu0 0.0
        %1122 = vmatpush2.msra.mxu0 0.0
        %1123 = vmatprep.subr.mxu0 0.0
        %1124 = vmatpush2.msra.mxu0 0.0
        %1125 = vmatprep.subr.mxu0 0.0
        %1126 = vmatpush2.msra.mxu0 0.0
        %1127 = vmatprep.subr.mxu0 0.0
        %1128 = vmatpush2.msra.mxu0 0.0
        %1129 = vmatprep.subr.mxu0 0.0
        %1130 = vmatpush2.msra.mxu0 0.0
        %1131 = vmatprep.subr.mxu0 0.0
        %1132 = vmatpush2.msra.mxu0 0.0
        %1133 = vmatprep.subr.mxu0 0.0
        %1134 = vmatpush2.msra.mxu0 0.0
        %1135 = vmatprep.subr.mxu0 0.0
        %1136 = vmatpush2.msra.mxu0 0.0
        %1137 = vmatprep.subr.mxu0 0.0
        %1138 = vmatpush2.msra.mxu0 0.0
        %1139 = vmatprep.subr.mxu0 0.0
        %1140 = vmatpush2.msra.mxu0 0.0
        %1141 = vmatprep.subr.mxu0 0.0
        %1142 = vmatpush2.msra.mxu0 0.0
        %1143 = vmatprep.subr.mxu0 0.0
        %1144 = vmatpush2.msra.mxu0 0.0
        %1145 = vmatprep.subr.mxu0 0.0
        %1146 = vmatpush2.msra.mxu0 0.0
        %1147 = vmatprep.mubr.f32.mxu0 0.0
        %1148 = vmatmul.mubr.f32.gmra.mxu0 %v965
        %v1149 = vpop.f32.mrf.mxu0
        %v1150 = vadd.f32 %v930, %v1149
        %v1151 = vpop.f32.mrf.mxu0
        %v1152 = vadd.f32 %v932, %v1151
        %1153 = vmatprep.mubr.f32.mxu0 0.0
        %1154 = vmatmul.mubr.f32.gmra.mxu0 %v968
        %v1155 = vpop.f32.mrf.mxu0
        %v1156 = vadd.f32 %v936, %v1155
        %v1157 = vpop.f32.mrf.mxu0
        %v1158 = vadd.f32 %v938, %v1157
        %1159 = vmatprep.mubr.f32.mxu0 0.0
        %1160 = vmatmul.mubr.f32.gmra.mxu0 %v971
        %v1161 = vpop.f32.mrf.mxu0
        %v1162 = vadd.f32 %v942, %v1161
        %v1163 = vpop.f32.mrf.mxu0
        %v1164 = vadd.f32 %v944, %v1163
        %1165 = vmatprep.mubr.f32.mxu0 0.0
        %1166 = vmatmul.mubr.f32.gmra.mxu0 %v974
        %v1167 = vpop.f32.mrf.mxu0
        %v1168 = vadd.f32 %v948, %v1167
        %v1169 = vpop.f32.mrf.mxu0
        %v1170 = vadd.f32 %v950, %v1169
        %1171 = vmatprep.mubr.f32.mxu0 0.0
        %1172 = vmatmul.mubr.f32.gmra.mxu0 %v977
        %v1173 = vpop.f32.mrf.mxu0
        %v1174 = vadd.f32 %v954, %v1173
        %v1175 = vpop.f32.mrf.mxu0
        %v1176 = vadd.f32 %v956, %v1175
        %1177 = vmatprep.mubr.f32.mxu0 0.0
        %1178 = vmatmul.mubr.f32.gmra.mxu0 %v980
        %v1179 = vpop.f32.mrf.mxu0
        %v1180 = vadd.f32 %v960, %v1179
        %v1181 = vpop.f32.mrf.mxu0
        %v1182 = vadd.f32 %v962, %v1181
        %1183 = vdwg.mxu0
        %v1184 = vmul.f32 %v1049, %v1049
        %v1185 = vmul.f32 %v1051, %v1051
        %v1186 = vmul.f32 %v1150, %v1150
        %v1187 = vmul.f32 %v1152, %v1152
        %v1188 = vmul.f32 %v1055, %v1055
        %v1189 = vmul.f32 %v1057, %v1057
        %v1190 = vmul.f32 %v1156, %v1156
        %v1191 = vmul.f32 %v1158, %v1158
        %v1192 = vmul.f32 %v1061, %v1061
        %v1193 = vmul.f32 %v1063, %v1063
        %v1194 = vmul.f32 %v1162, %v1162
        %v1195 = vmul.f32 %v1164, %v1164
        %v1196 = vmul.f32 %v1067, %v1067
        %v1197 = vmul.f32 %v1069, %v1069
        %v1198 = vmul.f32 %v1168, %v1168
        %v1199 = vmul.f32 %v1170, %v1170
        %v1200 = vmul.f32 %v1073, %v1073
        %v1201 = vmul.f32 %v1075, %v1075
        %v1202 = vmul.f32 %v1174, %v1174
        %v1203 = vmul.f32 %v1176, %v1176
        %v1204 = vmul.f32 %v1079, %v1079
        %v1205 = vmul.f32 %v1081, %v1081
        %v1206 = vmul.f32 %v1180, %v1180
        %v1207 = vmul.f32 %v1182, %v1182
        %v1208 = vadd.f32 %v1184, %v1196
        %v1209 = vadd.f32 %v1185, %v1197
        %v1210 = vadd.f32 %v1186, %v1198
        %v1211 = vadd.f32 %v1187, %v1199
        %v1212 = vadd.f32 %v1188, %v1200
        %v1213 = vadd.f32 %v1189, %v1201
        %v1214 = vadd.f32 %v1190, %v1202
        %v1215 = vadd.f32 %v1191, %v1203
        %v1216 = vadd.f32 %v1192, %v1204
        %v1217 = vadd.f32 %v1193, %v1205
        %v1218 = vadd.f32 %v1194, %v1206
        %v1219 = vadd.f32 %v1195, %v1207
        %vm1220 = vcmp.gt.f32.partialorder %v1208, 0.01
        %vm1221 = vcmp.gt.f32.partialorder %v1209, 0.01
        %vm1222 = vcmp.gt.f32.partialorder %v1210, 0.01
        %vm1223 = vcmp.gt.f32.partialorder %v1211, 0.01
        %vm1224 = vcmp.gt.f32.partialorder %v1212, 0.01
        %vm1225 = vcmp.gt.f32.partialorder %v1213, 0.01
        %vm1226 = vcmp.gt.f32.partialorder %v1214, 0.01
        %vm1227 = vcmp.gt.f32.partialorder %v1215, 0.01
        %vm1228 = vcmp.gt.f32.partialorder %v1216, 0.01
        %vm1229 = vcmp.gt.f32.partialorder %v1217, 0.01
        %vm1230 = vcmp.gt.f32.partialorder %v1218, 0.01
        %vm1231 = vcmp.gt.f32.partialorder %v1219, 0.01
        %v1232 = vlog2.pop %v1208
        %v1233 = vmul.f32 %v1232, 0.6931472
        %v1234 = vlog2.pop %v1209
        %v1235 = vmul.f32 %v1234, 0.6931472
        %v1236 = vlog2.pop %v1210
        %v1237 = vmul.f32 %v1236, 0.6931472
        %v1238 = vlog2.pop %v1211
        %v1239 = vmul.f32 %v1238, 0.6931472
        %v1240 = vlog2.pop %v1212
        %v1241 = vmul.f32 %v1240, 0.6931472
        %v1242 = vlog2.pop %v1213
        %v1243 = vmul.f32 %v1242, 0.6931472
        %v1244 = vlog2.pop %v1214
        %v1245 = vmul.f32 %v1244, 0.6931472
        %v1246 = vlog2.pop %v1215
        %v1247 = vmul.f32 %v1246, 0.6931472
        %v1248 = vlog2.pop %v1216
        %v1249 = vmul.f32 %v1248, 0.6931472
        %v1250 = vlog2.pop %v1217
        %v1251 = vmul.f32 %v1250, 0.6931472
        %v1252 = vlog2.pop %v1218
        %v1253 = vmul.f32 %v1252, 0.6931472
        %v1254 = vlog2.pop %v1219
        %v1255 = vmul.f32 %v1254, 0.6931472
        %v1256 = vmul.f32 %v1208, 50.0
        %v1257 = vmul.f32 %v1209, 50.0
        %v1258 = vmul.f32 %v1210, 50.0
        %v1259 = vmul.f32 %v1211, 50.0
        %v1260 = vmul.f32 %v1212, 50.0
        %v1261 = vmul.f32 %v1213, 50.0
        %v1262 = vmul.f32 %v1214, 50.0
        %v1263 = vmul.f32 %v1215, 50.0
        %v1264 = vmul.f32 %v1216, 50.0
        %v1265 = vmul.f32 %v1217, 50.0
        %v1266 = vmul.f32 %v1218, 50.0
        %v1267 = vmul.f32 %v1219, 50.0
        %v1268 = vadd.f32 %v1256, -5.1051702
        %v1269 = vadd.f32 %v1257, -5.1051702
        %v1270 = vadd.f32 %v1258, -5.1051702
        %v1271 = vadd.f32 %v1259, -5.1051702
        %v1272 = vadd.f32 %v1260, -5.1051702
        %v1273 = vadd.f32 %v1261, -5.1051702
        %v1274 = vadd.f32 %v1262, -5.1051702
        %v1275 = vadd.f32 %v1263, -5.1051702
        %v1276 = vadd.f32 %v1264, -5.1051702
        %v1277 = vadd.f32 %v1265, -5.1051702
        %v1278 = vadd.f32 %v1266, -5.1051702
        %v1279 = vadd.f32 %v1267, -5.1051702
        %v1280 = vsel %vm1220, %v1233, %v1268
        %v1281 = vsel %vm1221, %v1235, %v1269
        %v1282 = vsel %vm1222, %v1237, %v1270
        %v1283 = vsel %vm1223, %v1239, %v1271
        %v1284 = vsel %vm1224, %v1241, %v1272
        %v1285 = vsel %vm1225, %v1243, %v1273
        %v1286 = vsel %vm1226, %v1245, %v1274
        %v1287 = vsel %vm1227, %v1247, %v1275
        %v1288 = vsel %vm1228, %v1249, %v1276
        %v1289 = vsel %vm1229, %v1251, %v1277
        %v1290 = vsel %vm1230, %v1253, %v1278
        %v1291 = vsel %vm1231, %v1255, %v1279
        %v1292 = vsub.f32 %v1280, 15.0
        %v1293 = vsub.f32 %v1281, 15.0
        %v1294 = vsub.f32 %v1282, 15.0
        %v1295 = vsub.f32 %v1283, 15.0
        %v1296 = vsub.f32 %v1284, 15.0
        %v1297 = vsub.f32 %v1285, 15.0
        %v1298 = vsub.f32 %v1286, 15.0
        %v1299 = vsub.f32 %v1287, 15.0
        %v1300 = vsub.f32 %v1288, 15.0
        %v1301 = vsub.f32 %v1289, 15.0
        %v1302 = vsub.f32 %v1290, 15.0
        %v1303 = vsub.f32 %v1291, 15.0
        %v1304 = vmul.f32 %v1292, 0.25
        %v1305 = vmul.f32 %v1293, 0.25
        %v1306 = vmul.f32 %v1294, 0.25
        %v1307 = vmul.f32 %v1295, 0.25
        %v1308 = vmul.f32 %v1296, 0.25
        %v1309 = vmul.f32 %v1297, 0.25
        %v1310 = vmul.f32 %v1298, 0.25
        %v1311 = vmul.f32 %v1299, 0.25
        %v1312 = vmul.f32 %v1300, 0.25
        %v1313 = vmul.f32 %v1301, 0.25
        %v1314 = vmul.f32 %v1302, 0.25
        %v1315 = vmul.f32 %v1303, 0.25
        %1316 = vst [vmem:[%s653] sm:$0xff] %v1304
        %1317 = vst [vmem:[%s653 + $0x8] sm:$0xff] %v1305
        %1318 = vst [vmem:[%s653 + $0x10] sm:$0xff] %v1306
        %1319 = vst [vmem:[%s653 + $0x18] sm:$0xff] %v1307
        %1320 = vst [vmem:[%s653 + $0x20] sm:$0xff] %v1308
        %1321 = vst [vmem:[%s653 + $0x28] sm:$0xff] %v1309
        %1322 = vst [vmem:[%s653 + $0x30] sm:$0xff] %v1310
        %1323 = vst [vmem:[%s653 + $0x38] sm:$0xff] %v1311
        %1324 = vst [vmem:[%s653 + $0x40] sm:$0x1] %v1312
        %1325 = vst [vmem:[%s653 + $0x48] sm:$0x1] %v1313
        %1326 = vst [vmem:[%s653 + $0x50] sm:$0x1] %v1314
        %1327 = vst [vmem:[%s653 + $0x58] sm:$0x1] %v1315
        %s1328 = sand.u32 %s135, 1
        %s1329 = sand.u32 %s135, 1
        %s1330 = smul.addr %s1329, 96
        %s1331 = scalar_lea.vmem [#allocation3], %s1330
        // Predicated region
        $region103: #{tfjs_spectrogram.1} parent=97 // pred_check
          %p1332 = pneg %p145
        $region104: #{tfjs_spectrogram.1} parent=97 // pred_check_branch
          %1334 = sbr.rel (%p1332) target = $region106
        $region105: #{tfjs_spectrogram.1} parent=97 // pred_region
          %s1335 = smul.u32 4, %s20
          %s1336 = smul.addr %s19, 24
          %s1337 = sadd.s32 %s1335, %s1336
          %s1338 = smul.addr %s1337, 8
          %s1339 = scalar_lea.vmem %s4, %s1338
          // Predicated region
          $region107: #{tfjs_spectrogram.1} parent=105 // pred_check
            _
          $region108: #{tfjs_spectrogram.1} parent=105 // pred_check_branch
            %1341 = sbr.rel (0) target = $region110
          $region109: #{tfjs_spectrogram.1} parent=105 // pred_region
            // Predicated region
            $region111: #{tfjs_spectrogram.1} parent=109 // pred_check
              _
            $region112: #{tfjs_spectrogram.1} parent=109 // pred_check_branch
              %1343 = sbr.rel (0) target = $region114
            $region113: #{tfjs_spectrogram.1} parent=109 // pred_region
              loop: start=0, step=1, limit=1
              $region115: #{tfjs_spectrogram.1} parent=113 // loop_pre_header
                _
              $region116: #{tfjs_spectrogram.1} parent=113 // loop_header
                %s1345 = sphi 0, %s1349
                %p1346 = scmp.ge.s32.totalorder %s1345, 1
                %s1350 = sphi %s1331, %s1331
                %s1351 = sphi %s1339, %s1339
              $region117: #{tfjs_spectrogram.1} parent=113 // loop_header_branch
                %1348 = sbr.rel (%p1346) target = $region121
              $region118: #{tfjs_spectrogram.1} parent=113 // loop_body
                %v1352 = vld [vmem:[%s1350] sm:$0xff]
                %1353 = vst [vmem:[%s1351] sm:$0xff] %v1352
                %v1354 = vld [vmem:[%s1350 + $0x8] sm:$0xff]
                %1355 = vst [vmem:[%s1351 + $0x8] sm:$0xff] %v1354
                %v1356 = vld [vmem:[%s1350 + $0x10] sm:$0xff]
                %1357 = vst [vmem:[%s1351 + $0x10] sm:$0xff] %v1356
                %v1358 = vld [vmem:[%s1350 + $0x18] sm:$0xff]
                %1359 = vst [vmem:[%s1351 + $0x18] sm:$0xff] %v1358
                %v1360 = vld [vmem:[%s1350 + $0x20] sm:$0xff]
                %1361 = vst [vmem:[%s1351 + $0x40] sm:$0xff] %v1360
                %v1362 = vld [vmem:[%s1350 + $0x28] sm:$0xff]
                %1363 = vst [vmem:[%s1351 + $0x48] sm:$0xff] %v1362
                %v1364 = vld [vmem:[%s1350 + $0x30] sm:$0xff]
                %1365 = vst [vmem:[%s1351 + $0x50] sm:$0xff] %v1364
                %v1366 = vld [vmem:[%s1350 + $0x38] sm:$0xff]
                %1367 = vst [vmem:[%s1351 + $0x58] sm:$0xff] %v1366
                %v1368 = vld [vmem:[%s1350 + $0x40] sm:$0xff]
                %1369 = vst [vmem:[%s1351 + $0x80] sm:$0xff] %v1368
                %v1370 = vld [vmem:[%s1350 + $0x48] sm:$0xff]
                %1371 = vst [vmem:[%s1351 + $0x88] sm:$0xff] %v1370
                %v1372 = vld [vmem:[%s1350 + $0x50] sm:$0xff]
                %1373 = vst [vmem:[%s1351 + $0x90] sm:$0xff] %v1372
                %v1374 = vld [vmem:[%s1350 + $0x58] sm:$0xff]
                %1375 = vst [vmem:[%s1351 + $0x98] sm:$0xff] %v1374
              $region119: #{tfjs_spectrogram.1} parent=113 // loop_footer
                %s1349 = sadd.s32 1, %s1345
              $region120: #{tfjs_spectrogram.1} parent=113 // loop_footer_branch
                %1344 = sbr.rel target = $region116
              $region121: #{tfjs_spectrogram.1} parent=113 // loop_exit
                _
            $region114: #{tfjs_spectrogram.1} parent=109 // pred_fallthru
              _
            // Predicated region
            $region122: #{tfjs_spectrogram.1} parent=109 // pred_check
              _
            $region123: #{tfjs_spectrogram.1} parent=109 // pred_check_branch
              %1377 = sbr.rel target = $region125
            $region124: #{tfjs_spectrogram.1} parent=109 // pred_region
              _
            $region125: #{tfjs_spectrogram.1} parent=109 // pred_fallthru
              _
          $region110: #{tfjs_spectrogram.1} parent=105 // pred_fallthru
            _
          %1378 = vnop
        $region106: #{tfjs_spectrogram.1} parent=97 // pred_fallthru
          _
      $region98: #{tfjs_spectrogram.1} parent=5 // pred_fallthru
        _
      %p1379 = scmp.le.s32.totalorder 2, %s10
      // Predicated region
      $region126: #{tfjs_spectrogram.1} parent=5 // pred_check
        %p1380 = pneg %p1379
      $region127: #{tfjs_spectrogram.1} parent=5 // pred_check_branch
        %1382 = sbr.rel (%p1380) target = $region129
      $region128: #{tfjs_spectrogram.1} parent=5 // pred_region
        %s1383 = ssub.s32 %s10, 2
        // Predicated region
        $region130: #{tfjs_spectrogram.1} parent=128 // pred_check
          %p1384 = pneg %p151
        $region131: #{tfjs_spectrogram.1} parent=128 // pred_check_branch
          %1386 = sbr.rel (%p1384) target = $region133
        $region132: #{tfjs_spectrogram.1} parent=128 // pred_region
          %s1387 = sand.u32 %s136, 1
          %s1388 = sand.u32 %s136, 1
          %s1389 = smul.addr %s1388, 96
          %s1390 = scalar_lea.vmem [#allocation3], %s1389
        $region133: #{tfjs_spectrogram.1} parent=128 // pred_fallthru
          _
      $region129: #{tfjs_spectrogram.1} parent=5 // pred_fallthru
        _
    $region6: #{tfjs_spectrogram.1} parent=1 // loop_footer
      %s14 = sadd.s32 1, %s10
    $region7: #{tfjs_spectrogram.1} parent=1 // loop_footer_branch
      %9 = sbr.rel target = $region3
    $region8: #{tfjs_spectrogram.1} parent=1 // loop_exit
      _

</llo_original>
